<compile_context>
chip_gen: v5e
topology: v5e:2x2
jax: 0.10.0
libtpu: 0.0.40
codegen_flags: <defaults>
</compile_context>

<pallas_src>
import functools

import jax
import jax.numpy as jnp
from jax import lax
from jax.experimental import pallas as pl
from jax.experimental.pallas import tpu as pltpu

_NEG_BIG = -1e30  # finite stand-in for -inf (keeps exp()/max() NaN-free for empty bags)


def _round_up(n, m):
    return ((n + m - 1) // m) * m


# --------------------------------------------------------------------------- #
# Kernels
# --------------------------------------------------------------------------- #
def _milnet_attn_kernel(len_ref, x_ref, wv_ref, bv_ref, wu_ref, bu_ref,
                        ww_ref, bw_ref, out_ref, m_sc, l_sc, acc_sc):
    """Gated-attention MIL pooling with an online (streaming) masked softmax.

    Grid: (bag_groups, patch_tiles).  Scratch m/l/acc hold the running softmax
    max / normaliser / weighted feature sum for the Bt bags of the current group.
    """
    pt_i = pl.program_id(1)
    Bt, Pt, _ = x_ref.shape

    @pl.when(pt_i == 0)
    def _init():
        m_sc[...] = jnp.full_like(m_sc, _NEG_BIG)
        l_sc[...] = jnp.zeros_like(l_sc)
        acc_sc[...] = jnp.zeros_like(acc_sc)

    # Hoisted: shared by every bag of this group (avoids re-materialised broadcasts).
    wv = wv_ref[...]
    wu = wu_ref[...]
    bv = bv_ref[...]
    bu = bu_ref[...]
    ww = ww_ref[...]
    bw = bw_ref[...]
    patch0 = pt_i * Pt
    p_iota = lax.broadcasted_iota(jnp.int32, (Pt, 1), 0)

    for b in range(Bt):                          # static unroll over bags in the group
        x_b = x_ref[b]                           # (Pt, F) f32
        xc = x_b.astype(wv.dtype)                # bf16 (or f32) operands for the MXU

        hv = jnp.tanh(jnp.dot(xc, wv, preferred_element_type=jnp.float32) + bv)
        hu = jax.nn.sigmoid(jnp.dot(xc, wu, preferred_element_type=jnp.float32) + bu)
        # Linear(D, 1) kept as elementwise-mul + lane reduce (width-1 matmul wastes MXU).
        att = jnp.sum(hv * hu * ww, axis=-1, keepdims=True) + bw          # (Pt, 1)

        valid = (patch0 + p_iota) < len_ref[pl.ds(b, 1), :]               # (Pt, 1)

        m_prev = m_sc[pl.ds(b, 1), :]                                     # (1, 1)
        m_new = jnp.maximum(m_prev, jnp.max(jnp.where(valid, att, _NEG_BIG)))
        alpha = jnp.exp(m_prev - m_new)
        p = jnp.where(valid, jnp.exp(att - m_new), 0.0)                   # (Pt, 1)

        l_sc[pl.ds(b, 1), :] = alpha * l_sc[pl.ds(b, 1), :] + jnp.sum(p)
        # Patch-weighted feature sum on the MXU:  p^T @ x_b  ->  (1, F), f32 exact.
        w_b = pl.dot(p, x_b, trans_a=True)
        acc_sc[pl.ds(b, 1), :] = alpha * acc_sc[pl.ds(b, 1), :] + w_b
        m_sc[pl.ds(b, 1), :] = m_new

    @pl.when(pt_i == pl.num_programs(1) - 1)
    def _finish():
        l = l_sc[...]                                                     # (Bt, 1)
        inv = pl.reciprocal(jnp.where(l > 0.0, l, 1.0), approx=False)
        # lengths[b] == 0 -> PyTorch zeroes the whole weight row -> zero output row.
        out_ref[...] = jnp.where(l > 0.0, acc_sc[...] * inv, 0.0).astype(out_ref.dtype)


def _milnet_sum_kernel(x_ref, out_ref, acc_sc):
    """lengths=None path: PyTorch's softmax over a size-1 dim yields all-ones weights,
    so the output is the per-bag sum over patches, done as one MXU matmul with a 0/1
    bag-segment matrix (padded patch rows are zero, so they contribute nothing)."""
    pt_i = pl.program_id(1)
    Bt, Pt, F = x_ref.shape

    @pl.when(pt_i == 0)
    def _init():
        acc_sc[...] = jnp.zeros_like(acc_sc)

    x2 = x_ref[...].reshape(Bt * Pt, F)          # Pt % 8 == 0 -> layout-preserving
    row = lax.broadcasted_iota(jnp.int32, (Bt, Bt * Pt), 1)
    bag = lax.broadcasted_iota(jnp.int32, (Bt, Bt * Pt), 0)
    seg = ((row >= bag * Pt) & (row < (bag + 1) * Pt)).astype(jnp.float32)
    acc_sc[...] += jnp.dot(seg, x2, preferred_element_type=jnp.float32)

    @pl.when(pt_i == pl.num_programs(1) - 1)
    def _finish():
        out_ref[...] = acc_sc[...].astype(out_ref.dtype)


# --------------------------------------------------------------------------- #
# Host-side wrapper
# --------------------------------------------------------------------------- #
@functools.partial(
    jax.jit, static_argnames=("has_lengths", "compute_dtype", "patch_tile"))
def _milnet_call(x, lengths_arr, params, has_lengths, compute_dtype, patch_tile):
    B, P, F = x.shape

    # ---- tiling / padding -------------------------------------------------- #
    patch_tile = max(8, _round_up(patch_tile, 8))
    Pt = min(patch_tile, _round_up(P, 8))        # patch tile (multiple of 8)
    P_pad = _round_up(P, Pt)
    Bt = min(B, 8)                               # bags per grid step
    B_pad = _round_up(B, Bt)

    if (B_pad, P_pad) != (B, P):
        x = jnp.pad(x, ((0, B_pad - B), (0, P_pad - P), (0, 0)))

    grid = (B_pad // Bt, P_pad // Pt)
    x_spec = pl.BlockSpec((Bt, Pt, F), lambda bg, pt: (bg, pt, 0))
    out_spec = pl.BlockSpec((Bt, F), lambda bg, pt: (bg, 0))

    def const_spec(arr):
        return pl.BlockSpec(arr.shape, lambda bg, pt: (0, 0))

    if has_lengths:
        lens = jnp.minimum(lengths_arr.astype(jnp.int32), P)
        lens = jnp.pad(lens, (0, B_pad - B)).reshape(B_pad, 1)
        wv = params["wv"].astype(compute_dtype)
        wu = params["wu"].astype(compute_dtype)
        bv = params["bv"].astype(jnp.float32)
        bu = params["bu"].astype(jnp.float32)
        ww = params["ww"].astype(jnp.float32)
        bw = params["bw"].astype(jnp.float32)
        args = (lens, x, wv, bv, wu, bu, ww, bw)
        in_specs = [pl.BlockSpec((Bt, 1), lambda bg, pt: (bg, 0)), x_spec] + [
            const_spec(a) for a in (wv, bv, wu, bu, ww, bw)]
        kernel = _milnet_attn_kernel
        scratch = [pltpu.VMEM((Bt, 1), jnp.float32),    # running max
                   pltpu.VMEM((Bt, 1), jnp.float32),    # running normaliser
                   pltpu.VMEM((Bt, F), jnp.float32)]    # running weighted sum
    else:
        args = (x,)
        in_specs = [x_spec]
        kernel = _milnet_sum_kernel
        scratch = [pltpu.VMEM((Bt, F), jnp.float32)]

    out = pl.pallas_call(
        kernel,
        out_shape=jax.ShapeDtypeStruct((B_pad, F), jnp.float32),
        grid_spec=pltpu.PrefetchScalarGridSpec(
            num_scalar_prefetch=0,
            grid=grid,
            in_specs=in_specs,
            out_specs=out_spec,
            scratch_shapes=scratch,
        ),
        compiler_params=pltpu.CompilerParams(
            dimension_semantics=("parallel", "arbitrary"),
            vmem_limit_bytes=48 * 1024 * 1024,
        ),
    )(*args)
    return out[:B]


def milnet_forward(x, params, lengths=None, *,
                   compute_dtype=jnp.bfloat16, patch_tile=512):
    """MILNet forward.  x: (B, P, F) or (P, F) float32; lengths: (B,) ints or None.

    Returns the attention-weighted feature sum, shape (B, F) float32."""
    x = jnp.asarray(x, jnp.float32)
    if x.ndim == 2:                      # PyTorch treats 2-D input as a batch of one
        x = x[None]
    B = x.shape[0]
    if lengths is None:
        lens = jnp.zeros((B,), jnp.int32)   # unused placeholder
        has_lengths = False
    else:
        lens = jnp.asarray(lengths, jnp.int32)
        has_lengths = True
    return _milnet_call(x, lens, params, has_lengths, compute_dtype, int(patch_tile))


# --------------------------------------------------------------------------- #
# Parameters + pure-JAX reference
# --------------------------------------------------------------------------- #
def init_params(key, feature_len=768, att_inside=256):
    """Synthetic parameters matching MILAttention(featureLength, featureInside)."""
    ks = jax.random.split(key, 6)

    def lin_w(k, fin, fout):
        return jax.random.normal(k, (fin, fout), jnp.float32) / jnp.sqrt(fin)

    def lin_b(k, fout):
        return 0.01 * jax.random.normal(k, (1, fout), jnp.float32)

    F, D = feature_len, att_inside
    return {
        "wv": lin_w(ks[0], F, D), "bv": lin_b(ks[1], D),
        "wu": lin_w(ks[2], F, D), "bu": lin_b(ks[3], D),
        "ww": lin_w(ks[4], D, 1).reshape(1, D), "bw": lin_b(ks[5], 1),
    }


def milnet_reference(x, params, lengths=None):
    """Pure-JAX mirror of the PyTorch forward (f32)."""
    x = jnp.asarray(x, jnp.float32)
    if x.ndim == 2:
        x = x[None]
    B, P, _ = x.shape
    hv = jnp.tanh(x @ params["wv"] + params["bv"])
    hu = jax.nn.sigmoid(x @ params["wu"] + params["bu"])
    att = jnp.sum(hv * hu * params["ww"], axis=-1, keepdims=True) + params["bw"][0, 0]
    if lengths is None:
        w = jnp.ones_like(att)           # softmax over a size-1 dim -> all ones
    else:
        lengths = jnp.asarray(lengths, jnp.int32)
        idx = jnp.arange(P)[None, :, None]
        valid = idx < lengths[:, None, None]
        m = jnp.max(jnp.where(valid, att, -jnp.inf), axis=1, keepdims=True)
        e = jnp.where(valid, jnp.exp(att - m), 0.0)
        s = jnp.sum(e, axis=1, keepdims=True)
        w = jnp.where(s > 0, e / jnp.where(s > 0, s, 1.0), 0.0)   # empty bag -> zeros
    return jnp.sum(w * x, axis=1)


# --------------------------------------------------------------------------- #
if __name__ == "__main__":
    key = jax.random.PRNGKey(0)
    k_param, k_x = jax.random.split(key)

    B, P, F, D = 4, 26, 256, 128
    params = init_params(k_param, feature_len=F, att_inside=D)
    x = jax.random.normal(k_x, (B, P, F), jnp.float32)
    lengths = jnp.array([13, 26, 0, 20], dtype=jnp.int32)   # includes an empty bag

    ref = milnet_reference(x, params, lengths)
    ref_none = milnet_reference(x, params, None)

    # f32 math, streamed over 4 patch tiles (exercises the online masked softmax).
    out_f32 = jax.block_until_ready(
        milnet_forward(x, params, lengths, compute_dtype=jnp.float32, patch_tile=8))
    # f32 math, single patch tile.
    out_one = jax.block_until_ready(
        milnet_forward(x, params, lengths, compute_dtype=jnp.float32, patch_tile=512))
    # Production config: bf16 attention matmuls on the MXU (f32 accumulation).
    out_bf16 = jax.block_until_ready(
        milnet_forward(x, params, lengths, patch_tile=8))
    # lengths=None degenerate path (all-ones weights).
    out_none = jax.block_until_ready(
        milnet_forward(x, params, None, compute_dtype=jnp.float32, patch_tile=8))

    assert out_f32.shape == (B, F)
    assert jnp.allclose(out_f32, ref, atol=1e-4, rtol=1e-4)
    assert jnp.allclose(out_one, ref, atol=1e-4, rtol=1e-4)
    assert jnp.allclose(out_bf16, ref, atol=2e-2, rtol=2e-2)   # bf16 matmul tolerance
    assert jnp.allclose(out_none, ref_none, atol=1e-4, rtol=1e-4)
    print("KERNEL_OK")
</pallas_src>

<mosaic_0001>
module attributes {stable_mosaic.version = 11 : i64} {
  func.func @_milnet_attn_kernel(%arg0: i32, %arg1: i32, %arg2: memref<4x1xi32, #tpu.memory_space<vmem>>, %arg3: memref<4x8x256xf32, #tpu.memory_space<vmem>>, %arg4: memref<256x128xf32, #tpu.memory_space<vmem>>, %arg5: memref<1x128xf32, #tpu.memory_space<vmem>>, %arg6: memref<256x128xf32, #tpu.memory_space<vmem>>, %arg7: memref<1x128xf32, #tpu.memory_space<vmem>>, %arg8: memref<1x128xf32, #tpu.memory_space<vmem>>, %arg9: memref<1x1xf32, #tpu.memory_space<vmem>>, %arg10: memref<4x256xf32, #tpu.memory_space<vmem>>, %arg11: memref<4x1xf32, #tpu.memory_space<vmem>>, %arg12: memref<4x1xf32, #tpu.memory_space<vmem>>, %arg13: memref<4x256xf32, #tpu.memory_space<vmem>>) attributes {dimension_semantics = [#tpu.dimension_semantics<parallel>, #tpu.dimension_semantics<arbitrary>], iteration_bounds = array<i64: 1, 4>, scalar_prefetch = 0 : i64, scratch_operands = 3 : i64, tpu.core_type = #tpu.core_type<tc>, window_params = [{transform_indices = @transform_0, window_bounds = array<i64: 4, 1>}, {transform_indices = @transform_1, window_bounds = array<i64: 4, 8, 256>}, {pipeline_mode = #tpu.pipeline_mode<synchronous>, transform_indices = @transform_2, window_bounds = array<i64: 256, 128>}, {pipeline_mode = #tpu.pipeline_mode<synchronous>, transform_indices = @transform_3, window_bounds = array<i64: 1, 128>}, {pipeline_mode = #tpu.pipeline_mode<synchronous>, transform_indices = @transform_4, window_bounds = array<i64: 256, 128>}, {pipeline_mode = #tpu.pipeline_mode<synchronous>, transform_indices = @transform_5, window_bounds = array<i64: 1, 128>}, {pipeline_mode = #tpu.pipeline_mode<synchronous>, transform_indices = @transform_6, window_bounds = array<i64: 1, 128>}, {pipeline_mode = #tpu.pipeline_mode<synchronous>, transform_indices = @transform_7, window_bounds = array<i64: 1, 1>}, {transform_indices = @transform_8, window_bounds = array<i64: 4, 256>}]} {
    %c0_i32 = arith.constant 0 : i32
    %0 = arith.cmpi eq, %arg1, %c0_i32 : i32
    %1 = arith.extui %0 : i1 to i32
    %c0_i32_0 = arith.constant 0 : i32
    %2 = arith.cmpi ne, %1, %c0_i32_0 : i32
    scf.if %2 {
      %cst_113 = arith.constant -1.000000e+30 : f32
      %246 = vector.broadcast %cst_113 : f32 to vector<4x1xf32>
      %c0_114 = arith.constant 0 : index
      %c0_115 = arith.constant 0 : index
      %247 = vector.load %arg11[%c0_114, %c0_115] : memref<4x1xf32, #tpu.memory_space<vmem>>, vector<4x1xf32>
      tpu.vector_store %arg11[%c0_114, %c0_115], %246 {strides = array<i32>} : memref<4x1xf32, #tpu.memory_space<vmem>>, vector<4x1xf32>,
      %cst_116 = arith.constant 0.000000e+00 : f32
      %248 = vector.broadcast %cst_116 : f32 to vector<4x1xf32>
      %c0_117 = arith.constant 0 : index
      %c0_118 = arith.constant 0 : index
      %249 = vector.load %arg12[%c0_117, %c0_118] : memref<4x1xf32, #tpu.memory_space<vmem>>, vector<4x1xf32>
      tpu.vector_store %arg12[%c0_117, %c0_118], %248 {strides = array<i32>} : memref<4x1xf32, #tpu.memory_space<vmem>>, vector<4x1xf32>,
      %cst_119 = arith.constant 0.000000e+00 : f32
      %250 = vector.broadcast %cst_119 : f32 to vector<4x256xf32>
      %c0_120 = arith.constant 0 : index
      %c0_121 = arith.constant 0 : index
      %251 = vector.load %arg13[%c0_120, %c0_121] : memref<4x256xf32, #tpu.memory_space<vmem>>, vector<4x256xf32>
      tpu.vector_store %arg13[%c0_120, %c0_121], %250 {strides = array<i32>} : memref<4x256xf32, #tpu.memory_space<vmem>>, vector<4x256xf32>,
    } else {
    }
    %c0 = arith.constant 0 : index
    %c0_1 = arith.constant 0 : index
    %3 = vector.load %arg4[%c0, %c0_1] : memref<256x128xf32, #tpu.memory_space<vmem>>, vector<256x128xf32>
    %c0_2 = arith.constant 0 : index
    %c0_3 = arith.constant 0 : index
    %4 = vector.load %arg6[%c0_2, %c0_3] : memref<256x128xf32, #tpu.memory_space<vmem>>, vector<256x128xf32>
    %c0_4 = arith.constant 0 : index
    %c0_5 = arith.constant 0 : index
    %5 = vector.load %arg5[%c0_4, %c0_5] : memref<1x128xf32, #tpu.memory_space<vmem>>, vector<1x128xf32>
    %c0_6 = arith.constant 0 : index
    %c0_7 = arith.constant 0 : index
    %6 = vector.load %arg7[%c0_6, %c0_7] : memref<1x128xf32, #tpu.memory_space<vmem>>, vector<1x128xf32>
    %c0_8 = arith.constant 0 : index
    %c0_9 = arith.constant 0 : index
    %7 = vector.load %arg8[%c0_8, %c0_9] : memref<1x128xf32, #tpu.memory_space<vmem>>, vector<1x128xf32>
    %c0_10 = arith.constant 0 : index
    %c0_11 = arith.constant 0 : index
    %8 = vector.load %arg9[%c0_10, %c0_11] : memref<1x1xf32, #tpu.memory_space<vmem>>, vector<1x1xf32>
    %c8_i32 = arith.constant 8 : i32
    %9 = arith.muli %arg1, %c8_i32 : i32
    %10 = tpu.iota {dimensions = array<i32: 0>} : vector<8x1xi32>
    %c0_12 = arith.constant 0 : index
    %c0_13 = arith.constant 0 : index
    %c0_14 = arith.constant 0 : index
    %11 = vector.load %arg3[%c0_12, %c0_13, %c0_14] : memref<4x8x256xf32, #tpu.memory_space<vmem>>, vector<1x8x256xf32>
    %12 = vector.shape_cast %11 : vector<1x8x256xf32> to vector<8x256xf32>
    %cst = arith.constant dense<0.000000e+00> : vector<8x128xf32>
    %13 = tpu.matmul %12, %3, %cst {dimension_numbers = #tpu.dot_dimension_numbers<[1], [0], [0], [1], [0, 0, 1, 1], [], []>} : vector<8x256xf32>, vector<256x128xf32>, vector<8x128xf32> -> vector<8x128xf32>
    %14 = vector.broadcast %5 : vector<1x128xf32> to vector<8x128xf32>
    %15 = arith.addf %13, %14 : vector<8x128xf32>
    %16 = math.tanh %15 : vector<8x128xf32>
    %cst_15 = arith.constant dense<0.000000e+00> : vector<8x128xf32>
    %17 = tpu.matmul %12, %4, %cst_15 {dimension_numbers = #tpu.dot_dimension_numbers<[1], [0], [0], [1], [0, 0, 1, 1], [], []>} : vector<8x256xf32>, vector<256x128xf32>, vector<8x128xf32> -> vector<8x128xf32>
    %18 = vector.broadcast %6 : vector<1x128xf32> to vector<8x128xf32>
    %19 = arith.addf %17, %18 : vector<8x128xf32>
    %20 = arith.negf %19 : vector<8x128xf32>
    %21 = math.exp %20 : vector<8x128xf32>
    %cst_16 = arith.constant 1.000000e+00 : f32
    %22 = vector.broadcast %cst_16 : f32 to vector<8x128xf32>
    %23 = arith.addf %22, %21 : vector<8x128xf32>
    %24 = arith.divf %22, %23 : vector<8x128xf32>
    %25 = arith.mulf %16, %24 : vector<8x128xf32>
    %26 = vector.broadcast %7 : vector<1x128xf32> to vector<8x128xf32>
    %27 = arith.mulf %25, %26 : vector<8x128xf32>
    %cst_17 = arith.constant dense<0.000000e+00> : vector<8xf32>
    %28 = vector.multi_reduction <add>, %27, %cst_17 [1] : vector<8x128xf32> to vector<8xf32>
    %29 = vector.shape_cast %28 : vector<8xf32> to vector<8x1xf32>
    %30 = vector.broadcast %8 : vector<1x1xf32> to vector<8x1xf32>
    %31 = arith.addf %29, %30 : vector<8x1xf32>
    %32 = vector.broadcast %9 : i32 to vector<8x1xi32>
    %33 = arith.addi %32, %10 : vector<8x1xi32>
    %c0_18 = arith.constant 0 : index
    %c0_19 = arith.constant 0 : index
    %34 = vector.load %arg2[%c0_18, %c0_19] : memref<4x1xi32, #tpu.memory_space<vmem>>, vector<1x1xi32>
    %35 = vector.broadcast %34 : vector<1x1xi32> to vector<8x1xi32>
    %36 = arith.cmpi slt, %33, %35 : vector<8x1xi32>
    %c0_20 = arith.constant 0 : index
    %c0_21 = arith.constant 0 : index
    %37 = vector.load %arg11[%c0_20, %c0_21] : memref<4x1xf32, #tpu.memory_space<vmem>>, vector<1x1xf32>
    %cst_22 = arith.constant -1.000000e+30 : f32
    %38 = vector.broadcast %cst_22 : f32 to vector<8x1xf32>
    %39 = arith.select %36, %31, %38 : vector<8x1xi1>, vector<8x1xf32>
    %40 = vector.shape_cast %39 : vector<8x1xf32> to vector<1x8x1xf32>
    %cst_23 = arith.constant dense<0xFF800000> : vector<1xf32>
    %41 = vector.multi_reduction <maximumf>, %40, %cst_23 [1, 2] : vector<1x8x1xf32> to vector<1xf32>
    %42 = vector.shape_cast %41 : vector<1xf32> to vector<1x1x1xf32>
    %43 = vector.extract %42[0, 0, 0] : f32 from vector<1x1x1xf32>
    %44 = vector.broadcast %43 : f32 to vector<1x1xf32>
    %45 = arith.maximumf %37, %44 : vector<1x1xf32>
    %46 = arith.subf %37, %45 : vector<1x1xf32>
    %47 = math.exp %46 : vector<1x1xf32>
    %48 = vector.broadcast %45 : vector<1x1xf32> to vector<8x1xf32>
    %49 = arith.subf %31, %48 : vector<8x1xf32>
    %50 = math.exp %49 : vector<8x1xf32>
    %cst_24 = arith.constant 0.000000e+00 : f32
    %51 = vector.broadcast %cst_24 : f32 to vector<8x1xf32>
    %52 = arith.select %36, %50, %51 : vector<8x1xi1>, vector<8x1xf32>
    %c0_25 = arith.constant 0 : index
    %c0_26 = arith.constant 0 : index
    %53 = vector.load %arg12[%c0_25, %c0_26] : memref<4x1xf32, #tpu.memory_space<vmem>>, vector<1x1xf32>
    %54 = arith.mulf %47, %53 : vector<1x1xf32>
    %55 = vector.shape_cast %52 : vector<8x1xf32> to vector<1x8x1xf32>
    %cst_27 = arith.constant dense<0.000000e+00> : vector<1xf32>
    %56 = vector.multi_reduction <add>, %55, %cst_27 [1, 2] : vector<1x8x1xf32> to vector<1xf32>
    %57 = vector.shape_cast %56 : vector<1xf32> to vector<1x1x1xf32>
    %58 = vector.extract %57[0, 0, 0] : f32 from vector<1x1x1xf32>
    %59 = vector.broadcast %58 : f32 to vector<1x1xf32>
    %60 = arith.addf %54, %59 : vector<1x1xf32>
    %c0_28 = arith.constant 0 : index
    %c0_29 = arith.constant 0 : index
    %61 = vector.load %arg12[%c0_28, %c0_29] : memref<4x1xf32, #tpu.memory_space<vmem>>, vector<1x1xf32>
    tpu.vector_store %arg12[%c0_28, %c0_29], %60 {strides = array<i32>} : memref<4x1xf32, #tpu.memory_space<vmem>>, vector<1x1xf32>,
    %cst_30 = arith.constant dense<0.000000e+00> : vector<1x256xf32>
    %62 = tpu.matmul %52, %12, %cst_30 {dimension_numbers = #tpu.dot_dimension_numbers<[0], [0], [1], [1], [0, 1, 1, 1], [], []>} : vector<8x1xf32>, vector<8x256xf32>, vector<1x256xf32> -> vector<1x256xf32>
    %c0_31 = arith.constant 0 : index
    %c0_32 = arith.constant 0 : index
    %63 = vector.load %arg13[%c0_31, %c0_32] : memref<4x256xf32, #tpu.memory_space<vmem>>, vector<1x256xf32>
    %64 = vector.broadcast %47 : vector<1x1xf32> to vector<1x256xf32>
    %65 = arith.mulf %64, %63 : vector<1x256xf32>
    %66 = arith.addf %65, %62 : vector<1x256xf32>
    %c0_33 = arith.constant 0 : index
    %c0_34 = arith.constant 0 : index
    %67 = vector.load %arg13[%c0_33, %c0_34] : memref<4x256xf32, #tpu.memory_space<vmem>>, vector<1x256xf32>
    tpu.vector_store %arg13[%c0_33, %c0_34], %66 {strides = array<i32>} : memref<4x256xf32, #tpu.memory_space<vmem>>, vector<1x256xf32>,
    %c0_35 = arith.constant 0 : index
    %c0_36 = arith.constant 0 : index
    %68 = vector.load %arg11[%c0_35, %c0_36] : memref<4x1xf32, #tpu.memory_space<vmem>>, vector<1x1xf32>
    tpu.vector_store %arg11[%c0_35, %c0_36], %45 {strides = array<i32>} : memref<4x1xf32, #tpu.memory_space<vmem>>, vector<1x1xf32>,
    %c1 = arith.constant 1 : index
    %c0_37 = arith.constant 0 : index
    %c0_38 = arith.constant 0 : index
    %69 = vector.load %arg3[%c1, %c0_37, %c0_38] : memref<4x8x256xf32, #tpu.memory_space<vmem>>, vector<1x8x256xf32>
    %70 = vector.shape_cast %69 : vector<1x8x256xf32> to vector<8x256xf32>
    %cst_39 = arith.constant dense<0.000000e+00> : vector<8x128xf32>
    %71 = tpu.matmul %70, %3, %cst_39 {dimension_numbers = #tpu.dot_dimension_numbers<[1], [0], [0], [1], [0, 0, 1, 1], [], []>} : vector<8x256xf32>, vector<256x128xf32>, vector<8x128xf32> -> vector<8x128xf32>
    %72 = vector.broadcast %5 : vector<1x128xf32> to vector<8x128xf32>
    %73 = arith.addf %71, %72 : vector<8x128xf32>
    %74 = math.tanh %73 : vector<8x128xf32>
    %cst_40 = arith.constant dense<0.000000e+00> : vector<8x128xf32>
    %75 = tpu.matmul %70, %4, %cst_40 {dimension_numbers = #tpu.dot_dimension_numbers<[1], [0], [0], [1], [0, 0, 1, 1], [], []>} : vector<8x256xf32>, vector<256x128xf32>, vector<8x128xf32> -> vector<8x128xf32>
    %76 = vector.broadcast %6 : vector<1x128xf32> to vector<8x128xf32>
    %77 = arith.addf %75, %76 : vector<8x128xf32>
    %78 = arith.negf %77 : vector<8x128xf32>
    %79 = math.exp %78 : vector<8x128xf32>
    %cst_41 = arith.constant 1.000000e+00 : f32
    %80 = vector.broadcast %cst_41 : f32 to vector<8x128xf32>
    %81 = arith.addf %80, %79 : vector<8x128xf32>
    %82 = arith.divf %80, %81 : vector<8x128xf32>
    %83 = arith.mulf %74, %82 : vector<8x128xf32>
    %84 = vector.broadcast %7 : vector<1x128xf32> to vector<8x128xf32>
    %85 = arith.mulf %83, %84 : vector<8x128xf32>
    %cst_42 = arith.constant dense<0.000000e+00> : vector<8xf32>
    %86 = vector.multi_reduction <add>, %85, %cst_42 [1] : vector<8x128xf32> to vector<8xf32>
    %87 = vector.shape_cast %86 : vector<8xf32> to vector<8x1xf32>
    %88 = vector.broadcast %8 : vector<1x1xf32> to vector<8x1xf32>
    %89 = arith.addf %87, %88 : vector<8x1xf32>
    %90 = vector.broadcast %9 : i32 to vector<8x1xi32>
    %91 = arith.addi %90, %10 : vector<8x1xi32>
    %c1_43 = arith.constant 1 : index
    %c0_44 = arith.constant 0 : index
    %92 = vector.load %arg2[%c1_43, %c0_44] : memref<4x1xi32, #tpu.memory_space<vmem>>, vector<1x1xi32>
    %93 = vector.broadcast %92 : vector<1x1xi32> to vector<8x1xi32>
    %94 = arith.cmpi slt, %91, %93 : vector<8x1xi32>
    %c1_45 = arith.constant 1 : index
    %c0_46 = arith.constant 0 : index
    %95 = vector.load %arg11[%c1_45, %c0_46] : memref<4x1xf32, #tpu.memory_space<vmem>>, vector<1x1xf32>
    %cst_47 = arith.constant -1.000000e+30 : f32
    %96 = vector.broadcast %cst_47 : f32 to vector<8x1xf32>
    %97 = arith.select %94, %89, %96 : vector<8x1xi1>, vector<8x1xf32>
    %98 = vector.shape_cast %97 : vector<8x1xf32> to vector<1x8x1xf32>
    %cst_48 = arith.constant dense<0xFF800000> : vector<1xf32>
    %99 = vector.multi_reduction <maximumf>, %98, %cst_48 [1, 2] : vector<1x8x1xf32> to vector<1xf32>
    %100 = vector.shape_cast %99 : vector<1xf32> to vector<1x1x1xf32>
    %101 = vector.extract %100[0, 0, 0] : f32 from vector<1x1x1xf32>
    %102 = vector.broadcast %101 : f32 to vector<1x1xf32>
    %103 = arith.maximumf %95, %102 : vector<1x1xf32>
    %104 = arith.subf %95, %103 : vector<1x1xf32>
    %105 = math.exp %104 : vector<1x1xf32>
    %106 = vector.broadcast %103 : vector<1x1xf32> to vector<8x1xf32>
    %107 = arith.subf %89, %106 : vector<8x1xf32>
    %108 = math.exp %107 : vector<8x1xf32>
    %cst_49 = arith.constant 0.000000e+00 : f32
    %109 = vector.broadcast %cst_49 : f32 to vector<8x1xf32>
    %110 = arith.select %94, %108, %109 : vector<8x1xi1>, vector<8x1xf32>
    %c1_50 = arith.constant 1 : index
    %c0_51 = arith.constant 0 : index
    %111 = vector.load %arg12[%c1_50, %c0_51] : memref<4x1xf32, #tpu.memory_space<vmem>>, vector<1x1xf32>
    %112 = arith.mulf %105, %111 : vector<1x1xf32>
    %113 = vector.shape_cast %110 : vector<8x1xf32> to vector<1x8x1xf32>
    %cst_52 = arith.constant dense<0.000000e+00> : vector<1xf32>
    %114 = vector.multi_reduction <add>, %113, %cst_52 [1, 2] : vector<1x8x1xf32> to vector<1xf32>
    %115 = vector.shape_cast %114 : vector<1xf32> to vector<1x1x1xf32>
    %116 = vector.extract %115[0, 0, 0] : f32 from vector<1x1x1xf32>
    %117 = vector.broadcast %116 : f32 to vector<1x1xf32>
    %118 = arith.addf %112, %117 : vector<1x1xf32>
    %c1_53 = arith.constant 1 : index
    %c0_54 = arith.constant 0 : index
    %119 = vector.load %arg12[%c1_53, %c0_54] : memref<4x1xf32, #tpu.memory_space<vmem>>, vector<1x1xf32>
    tpu.vector_store %arg12[%c1_53, %c0_54], %118 {strides = array<i32>} : memref<4x1xf32, #tpu.memory_space<vmem>>, vector<1x1xf32>,
    %cst_55 = arith.constant dense<0.000000e+00> : vector<1x256xf32>
    %120 = tpu.matmul %110, %70, %cst_55 {dimension_numbers = #tpu.dot_dimension_numbers<[0], [0], [1], [1], [0, 1, 1, 1], [], []>} : vector<8x1xf32>, vector<8x256xf32>, vector<1x256xf32> -> vector<1x256xf32>
    %c1_56 = arith.constant 1 : index
    %c0_57 = arith.constant 0 : index
    %121 = vector.load %arg13[%c1_56, %c0_57] : memref<4x256xf32, #tpu.memory_space<vmem>>, vector<1x256xf32>
    %122 = vector.broadcast %105 : vector<1x1xf32> to vector<1x256xf32>
    %123 = arith.mulf %122, %121 : vector<1x256xf32>
    %124 = arith.addf %123, %120 : vector<1x256xf32>
    %c1_58 = arith.constant 1 : index
    %c0_59 = arith.constant 0 : index
    %125 = vector.load %arg13[%c1_58, %c0_59] : memref<4x256xf32, #tpu.memory_space<vmem>>, vector<1x256xf32>
    tpu.vector_store %arg13[%c1_58, %c0_59], %124 {strides = array<i32>} : memref<4x256xf32, #tpu.memory_space<vmem>>, vector<1x256xf32>,
    %c1_60 = arith.constant 1 : index
    %c0_61 = arith.constant 0 : index
    %126 = vector.load %arg11[%c1_60, %c0_61] : memref<4x1xf32, #tpu.memory_space<vmem>>, vector<1x1xf32>
    tpu.vector_store %arg11[%c1_60, %c0_61], %103 {strides = array<i32>} : memref<4x1xf32, #tpu.memory_space<vmem>>, vector<1x1xf32>,
    %c2 = arith.constant 2 : index
    %c0_62 = arith.constant 0 : index
    %c0_63 = arith.constant 0 : index
    %127 = vector.load %arg3[%c2, %c0_62, %c0_63] : memref<4x8x256xf32, #tpu.memory_space<vmem>>, vector<1x8x256xf32>
    %128 = vector.shape_cast %127 : vector<1x8x256xf32> to vector<8x256xf32>
    %cst_64 = arith.constant dense<0.000000e+00> : vector<8x128xf32>
    %129 = tpu.matmul %128, %3, %cst_64 {dimension_numbers = #tpu.dot_dimension_numbers<[1], [0], [0], [1], [0, 0, 1, 1], [], []>} : vector<8x256xf32>, vector<256x128xf32>, vector<8x128xf32> -> vector<8x128xf32>
    %130 = vector.broadcast %5 : vector<1x128xf32> to vector<8x128xf32>
    %131 = arith.addf %129, %130 : vector<8x128xf32>
    %132 = math.tanh %131 : vector<8x128xf32>
    %cst_65 = arith.constant dense<0.000000e+00> : vector<8x128xf32>
    %133 = tpu.matmul %128, %4, %cst_65 {dimension_numbers = #tpu.dot_dimension_numbers<[1], [0], [0], [1], [0, 0, 1, 1], [], []>} : vector<8x256xf32>, vector<256x128xf32>, vector<8x128xf32> -> vector<8x128xf32>
    %134 = vector.broadcast %6 : vector<1x128xf32> to vector<8x128xf32>
    %135 = arith.addf %133, %134 : vector<8x128xf32>
    %136 = arith.negf %135 : vector<8x128xf32>
    %137 = math.exp %136 : vector<8x128xf32>
    %cst_66 = arith.constant 1.000000e+00 : f32
    %138 = vector.broadcast %cst_66 : f32 to vector<8x128xf32>
    %139 = arith.addf %138, %137 : vector<8x128xf32>
    %140 = arith.divf %138, %139 : vector<8x128xf32>
    %141 = arith.mulf %132, %140 : vector<8x128xf32>
    %142 = vector.broadcast %7 : vector<1x128xf32> to vector<8x128xf32>
    %143 = arith.mulf %141, %142 : vector<8x128xf32>
    %cst_67 = arith.constant dense<0.000000e+00> : vector<8xf32>
    %144 = vector.multi_reduction <add>, %143, %cst_67 [1] : vector<8x128xf32> to vector<8xf32>
    %145 = vector.shape_cast %144 : vector<8xf32> to vector<8x1xf32>
    %146 = vector.broadcast %8 : vector<1x1xf32> to vector<8x1xf32>
    %147 = arith.addf %145, %146 : vector<8x1xf32>
    %148 = vector.broadcast %9 : i32 to vector<8x1xi32>
    %149 = arith.addi %148, %10 : vector<8x1xi32>
    %c2_68 = arith.constant 2 : index
    %c0_69 = arith.constant 0 : index
    %150 = vector.load %arg2[%c2_68, %c0_69] : memref<4x1xi32, #tpu.memory_space<vmem>>, vector<1x1xi32>
    %151 = vector.broadcast %150 : vector<1x1xi32> to vector<8x1xi32>
    %152 = arith.cmpi slt, %149, %151 : vector<8x1xi32>
    %c2_70 = arith.constant 2 : index
    %c0_71 = arith.constant 0 : index
    %153 = vector.load %arg11[%c2_70, %c0_71] : memref<4x1xf32, #tpu.memory_space<vmem>>, vector<1x1xf32>
    %cst_72 = arith.constant -1.000000e+30 : f32
    %154 = vector.broadcast %cst_72 : f32 to vector<8x1xf32>
    %155 = arith.select %152, %147, %154 : vector<8x1xi1>, vector<8x1xf32>
    %156 = vector.shape_cast %155 : vector<8x1xf32> to vector<1x8x1xf32>
    %cst_73 = arith.constant dense<0xFF800000> : vector<1xf32>
    %157 = vector.multi_reduction <maximumf>, %156, %cst_73 [1, 2] : vector<1x8x1xf32> to vector<1xf32>
    %158 = vector.shape_cast %157 : vector<1xf32> to vector<1x1x1xf32>
    %159 = vector.extract %158[0, 0, 0] : f32 from vector<1x1x1xf32>
    %160 = vector.broadcast %159 : f32 to vector<1x1xf32>
    %161 = arith.maximumf %153, %160 : vector<1x1xf32>
    %162 = arith.subf %153, %161 : vector<1x1xf32>
    %163 = math.exp %162 : vector<1x1xf32>
    %164 = vector.broadcast %161 : vector<1x1xf32> to vector<8x1xf32>
    %165 = arith.subf %147, %164 : vector<8x1xf32>
    %166 = math.exp %165 : vector<8x1xf32>
    %cst_74 = arith.constant 0.000000e+00 : f32
    %167 = vector.broadcast %cst_74 : f32 to vector<8x1xf32>
    %168 = arith.select %152, %166, %167 : vector<8x1xi1>, vector<8x1xf32>
    %c2_75 = arith.constant 2 : index
    %c0_76 = arith.constant 0 : index
    %169 = vector.load %arg12[%c2_75, %c0_76] : memref<4x1xf32, #tpu.memory_space<vmem>>, vector<1x1xf32>
    %170 = arith.mulf %163, %169 : vector<1x1xf32>
    %171 = vector.shape_cast %168 : vector<8x1xf32> to vector<1x8x1xf32>
    %cst_77 = arith.constant dense<0.000000e+00> : vector<1xf32>
    %172 = vector.multi_reduction <add>, %171, %cst_77 [1, 2] : vector<1x8x1xf32> to vector<1xf32>
    %173 = vector.shape_cast %172 : vector<1xf32> to vector<1x1x1xf32>
    %174 = vector.extract %173[0, 0, 0] : f32 from vector<1x1x1xf32>
    %175 = vector.broadcast %174 : f32 to vector<1x1xf32>
    %176 = arith.addf %170, %175 : vector<1x1xf32>
    %c2_78 = arith.constant 2 : index
    %c0_79 = arith.constant 0 : index
    %177 = vector.load %arg12[%c2_78, %c0_79] : memref<4x1xf32, #tpu.memory_space<vmem>>, vector<1x1xf32>
    tpu.vector_store %arg12[%c2_78, %c0_79], %176 {strides = array<i32>} : memref<4x1xf32, #tpu.memory_space<vmem>>, vector<1x1xf32>,
    %cst_80 = arith.constant dense<0.000000e+00> : vector<1x256xf32>
    %178 = tpu.matmul %168, %128, %cst_80 {dimension_numbers = #tpu.dot_dimension_numbers<[0], [0], [1], [1], [0, 1, 1, 1], [], []>} : vector<8x1xf32>, vector<8x256xf32>, vector<1x256xf32> -> vector<1x256xf32>
    %c2_81 = arith.constant 2 : index
    %c0_82 = arith.constant 0 : index
    %179 = vector.load %arg13[%c2_81, %c0_82] : memref<4x256xf32, #tpu.memory_space<vmem>>, vector<1x256xf32>
    %180 = vector.broadcast %163 : vector<1x1xf32> to vector<1x256xf32>
    %181 = arith.mulf %180, %179 : vector<1x256xf32>
    %182 = arith.addf %181, %178 : vector<1x256xf32>
    %c2_83 = arith.constant 2 : index
    %c0_84 = arith.constant 0 : index
    %183 = vector.load %arg13[%c2_83, %c0_84] : memref<4x256xf32, #tpu.memory_space<vmem>>, vector<1x256xf32>
    tpu.vector_store %arg13[%c2_83, %c0_84], %182 {strides = array<i32>} : memref<4x256xf32, #tpu.memory_space<vmem>>, vector<1x256xf32>,
    %c2_85 = arith.constant 2 : index
    %c0_86 = arith.constant 0 : index
    %184 = vector.load %arg11[%c2_85, %c0_86] : memref<4x1xf32, #tpu.memory_space<vmem>>, vector<1x1xf32>
    tpu.vector_store %arg11[%c2_85, %c0_86], %161 {strides = array<i32>} : memref<4x1xf32, #tpu.memory_space<vmem>>, vector<1x1xf32>,
    %c3 = arith.constant 3 : index
    %c0_87 = arith.constant 0 : index
    %c0_88 = arith.constant 0 : index
    %185 = vector.load %arg3[%c3, %c0_87, %c0_88] : memref<4x8x256xf32, #tpu.memory_space<vmem>>, vector<1x8x256xf32>
    %186 = vector.shape_cast %185 : vector<1x8x256xf32> to vector<8x256xf32>
    %cst_89 = arith.constant dense<0.000000e+00> : vector<8x128xf32>
    %187 = tpu.matmul %186, %3, %cst_89 {dimension_numbers = #tpu.dot_dimension_numbers<[1], [0], [0], [1], [0, 0, 1, 1], [], []>} : vector<8x256xf32>, vector<256x128xf32>, vector<8x128xf32> -> vector<8x128xf32>
    %188 = vector.broadcast %5 : vector<1x128xf32> to vector<8x128xf32>
    %189 = arith.addf %187, %188 : vector<8x128xf32>
    %190 = math.tanh %189 : vector<8x128xf32>
    %cst_90 = arith.constant dense<0.000000e+00> : vector<8x128xf32>
    %191 = tpu.matmul %186, %4, %cst_90 {dimension_numbers = #tpu.dot_dimension_numbers<[1], [0], [0], [1], [0, 0, 1, 1], [], []>} : vector<8x256xf32>, vector<256x128xf32>, vector<8x128xf32> -> vector<8x128xf32>
    %192 = vector.broadcast %6 : vector<1x128xf32> to vector<8x128xf32>
    %193 = arith.addf %191, %192 : vector<8x128xf32>
    %194 = arith.negf %193 : vector<8x128xf32>
    %195 = math.exp %194 : vector<8x128xf32>
    %cst_91 = arith.constant 1.000000e+00 : f32
    %196 = vector.broadcast %cst_91 : f32 to vector<8x128xf32>
    %197 = arith.addf %196, %195 : vector<8x128xf32>
    %198 = arith.divf %196, %197 : vector<8x128xf32>
    %199 = arith.mulf %190, %198 : vector<8x128xf32>
    %200 = vector.broadcast %7 : vector<1x128xf32> to vector<8x128xf32>
    %201 = arith.mulf %199, %200 : vector<8x128xf32>
    %cst_92 = arith.constant dense<0.000000e+00> : vector<8xf32>
    %202 = vector.multi_reduction <add>, %201, %cst_92 [1] : vector<8x128xf32> to vector<8xf32>
    %203 = vector.shape_cast %202 : vector<8xf32> to vector<8x1xf32>
    %204 = vector.broadcast %8 : vector<1x1xf32> to vector<8x1xf32>
    %205 = arith.addf %203, %204 : vector<8x1xf32>
    %206 = vector.broadcast %9 : i32 to vector<8x1xi32>
    %207 = arith.addi %206, %10 : vector<8x1xi32>
    %c3_93 = arith.constant 3 : index
    %c0_94 = arith.constant 0 : index
    %208 = vector.load %arg2[%c3_93, %c0_94] : memref<4x1xi32, #tpu.memory_space<vmem>>, vector<1x1xi32>
    %209 = vector.broadcast %208 : vector<1x1xi32> to vector<8x1xi32>
    %210 = arith.cmpi slt, %207, %209 : vector<8x1xi32>
    %c3_95 = arith.constant 3 : index
    %c0_96 = arith.constant 0 : index
    %211 = vector.load %arg11[%c3_95, %c0_96] : memref<4x1xf32, #tpu.memory_space<vmem>>, vector<1x1xf32>
    %cst_97 = arith.constant -1.000000e+30 : f32
    %212 = vector.broadcast %cst_97 : f32 to vector<8x1xf32>
    %213 = arith.select %210, %205, %212 : vector<8x1xi1>, vector<8x1xf32>
    %214 = vector.shape_cast %213 : vector<8x1xf32> to vector<1x8x1xf32>
    %cst_98 = arith.constant dense<0xFF800000> : vector<1xf32>
    %215 = vector.multi_reduction <maximumf>, %214, %cst_98 [1, 2] : vector<1x8x1xf32> to vector<1xf32>
    %216 = vector.shape_cast %215 : vector<1xf32> to vector<1x1x1xf32>
    %217 = vector.extract %216[0, 0, 0] : f32 from vector<1x1x1xf32>
    %218 = vector.broadcast %217 : f32 to vector<1x1xf32>
    %219 = arith.maximumf %211, %218 : vector<1x1xf32>
    %220 = arith.subf %211, %219 : vector<1x1xf32>
    %221 = math.exp %220 : vector<1x1xf32>
    %222 = vector.broadcast %219 : vector<1x1xf32> to vector<8x1xf32>
    %223 = arith.subf %205, %222 : vector<8x1xf32>
    %224 = math.exp %223 : vector<8x1xf32>
    %cst_99 = arith.constant 0.000000e+00 : f32
    %225 = vector.broadcast %cst_99 : f32 to vector<8x1xf32>
    %226 = arith.select %210, %224, %225 : vector<8x1xi1>, vector<8x1xf32>
    %c3_100 = arith.constant 3 : index
    %c0_101 = arith.constant 0 : index
    %227 = vector.load %arg12[%c3_100, %c0_101] : memref<4x1xf32, #tpu.memory_space<vmem>>, vector<1x1xf32>
    %228 = arith.mulf %221, %227 : vector<1x1xf32>
    %229 = vector.shape_cast %226 : vector<8x1xf32> to vector<1x8x1xf32>
    %cst_102 = arith.constant dense<0.000000e+00> : vector<1xf32>
    %230 = vector.multi_reduction <add>, %229, %cst_102 [1, 2] : vector<1x8x1xf32> to vector<1xf32>
    %231 = vector.shape_cast %230 : vector<1xf32> to vector<1x1x1xf32>
    %232 = vector.extract %231[0, 0, 0] : f32 from vector<1x1x1xf32>
    %233 = vector.broadcast %232 : f32 to vector<1x1xf32>
    %234 = arith.addf %228, %233 : vector<1x1xf32>
    %c3_103 = arith.constant 3 : index
    %c0_104 = arith.constant 0 : index
    %235 = vector.load %arg12[%c3_103, %c0_104] : memref<4x1xf32, #tpu.memory_space<vmem>>, vector<1x1xf32>
    tpu.vector_store %arg12[%c3_103, %c0_104], %234 {strides = array<i32>} : memref<4x1xf32, #tpu.memory_space<vmem>>, vector<1x1xf32>,
    %cst_105 = arith.constant dense<0.000000e+00> : vector<1x256xf32>
    %236 = tpu.matmul %226, %186, %cst_105 {dimension_numbers = #tpu.dot_dimension_numbers<[0], [0], [1], [1], [0, 1, 1, 1], [], []>} : vector<8x1xf32>, vector<8x256xf32>, vector<1x256xf32> -> vector<1x256xf32>
    %c3_106 = arith.constant 3 : index
    %c0_107 = arith.constant 0 : index
    %237 = vector.load %arg13[%c3_106, %c0_107] : memref<4x256xf32, #tpu.memory_space<vmem>>, vector<1x256xf32>
    %238 = vector.broadcast %221 : vector<1x1xf32> to vector<1x256xf32>
    %239 = arith.mulf %238, %237 : vector<1x256xf32>
    %240 = arith.addf %239, %236 : vector<1x256xf32>
    %c3_108 = arith.constant 3 : index
    %c0_109 = arith.constant 0 : index
    %241 = vector.load %arg13[%c3_108, %c0_109] : memref<4x256xf32, #tpu.memory_space<vmem>>, vector<1x256xf32>
    tpu.vector_store %arg13[%c3_108, %c0_109], %240 {strides = array<i32>} : memref<4x256xf32, #tpu.memory_space<vmem>>, vector<1x256xf32>,
    %c3_110 = arith.constant 3 : index
    %c0_111 = arith.constant 0 : index
    %242 = vector.load %arg11[%c3_110, %c0_111] : memref<4x1xf32, #tpu.memory_space<vmem>>, vector<1x1xf32>
    tpu.vector_store %arg11[%c3_110, %c0_111], %219 {strides = array<i32>} : memref<4x1xf32, #tpu.memory_space<vmem>>, vector<1x1xf32>,
    %c3_i32 = arith.constant 3 : i32
    %243 = arith.cmpi eq, %arg1, %c3_i32 : i32
    %244 = arith.extui %243 : i1 to i32
    %c0_i32_112 = arith.constant 0 : i32
    %245 = arith.cmpi ne, %244, %c0_i32_112 : i32
    scf.if %245 {
      %c0_113 = arith.constant 0 : index
      %c0_114 = arith.constant 0 : index
      %246 = vector.load %arg12[%c0_113, %c0_114] : memref<4x1xf32, #tpu.memory_space<vmem>>, vector<4x1xf32>
      %cst_115 = arith.constant 0.000000e+00 : f32
      %247 = vector.broadcast %cst_115 : f32 to vector<4x1xf32>
      %248 = arith.cmpf ogt, %246, %247 : vector<4x1xf32>
      %cst_116 = arith.constant 1.000000e+00 : f32
      %249 = vector.broadcast %cst_116 : f32 to vector<4x1xf32>
      %250 = arith.select %248, %246, %249 : vector<4x1xi1>, vector<4x1xf32>
      %251 = tpu.reciprocal %250 : vector<4x1xf32> -> vector<4x1xf32>
      %cst_117 = arith.constant 0.000000e+00 : f32
      %252 = vector.broadcast %cst_117 : f32 to vector<4x1xf32>
      %253 = arith.cmpf ogt, %246, %252 : vector<4x1xf32>
      %c0_118 = arith.constant 0 : index
      %c0_119 = arith.constant 0 : index
      %254 = vector.load %arg13[%c0_118, %c0_119] : memref<4x256xf32, #tpu.memory_space<vmem>>, vector<4x256xf32>
      %255 = vector.broadcast %251 : vector<4x1xf32> to vector<4x256xf32>
      %256 = arith.mulf %254, %255 : vector<4x256xf32>
      %cst_120 = arith.constant 0.000000e+00 : f32
      %257 = vector.shape_cast %253 : vector<4x1xi1> to vector<4x1xi1>
      %258 = vector.broadcast %257 : vector<4x1xi1> to vector<4x256xi1>
      %259 = vector.broadcast %cst_120 : f32 to vector<4x256xf32>
      %260 = arith.select %258, %256, %259 : vector<4x256xi1>, vector<4x256xf32>
      %c0_121 = arith.constant 0 : index
      %c0_122 = arith.constant 0 : index
      %261 = vector.load %arg10[%c0_121, %c0_122] : memref<4x256xf32, #tpu.memory_space<vmem>>, vector<4x256xf32>
      tpu.vector_store %arg10[%c0_121, %c0_122], %260 {strides = array<i32>} : memref<4x256xf32, #tpu.memory_space<vmem>>, vector<4x256xf32>,
    } else {
    }
    return
  }
  func.func @transform_0(%arg0: i32, %arg1: i32) -> (i32, i32) {
    %c0_i32 = arith.constant 0 : i32
    %c0_i32_0 = arith.constant 0 : i32
    return %arg0, %c0_i32 : i32, i32
  }
  func.func @transform_1(%arg0: i32, %arg1: i32) -> (i32, i32, i32) {
    %c0_i32 = arith.constant 0 : i32
    %c0_i32_0 = arith.constant 0 : i32
    return %arg0, %arg1, %c0_i32 : i32, i32, i32
  }
  func.func @transform_2(%arg0: i32, %arg1: i32) -> (i32, i32) {
    %c0_i32 = arith.constant 0 : i32
    %c0_i32_0 = arith.constant 0 : i32
    %c0_i32_1 = arith.constant 0 : i32
    return %c0_i32, %c0_i32_0 : i32, i32
  }
  func.func @transform_3(%arg0: i32, %arg1: i32) -> (i32, i32) {
    %c0_i32 = arith.constant 0 : i32
    %c0_i32_0 = arith.constant 0 : i32
    %c0_i32_1 = arith.constant 0 : i32
    return %c0_i32, %c0_i32_0 : i32, i32
  }
  func.func @transform_4(%arg0: i32, %arg1: i32) -> (i32, i32) {
    %c0_i32 = arith.constant 0 : i32
    %c0_i32_0 = arith.constant 0 : i32
    %c0_i32_1 = arith.constant 0 : i32
    return %c0_i32, %c0_i32_0 : i32, i32
  }
  func.func @transform_5(%arg0: i32, %arg1: i32) -> (i32, i32) {
    %c0_i32 = arith.constant 0 : i32
    %c0_i32_0 = arith.constant 0 : i32
    %c0_i32_1 = arith.constant 0 : i32
    return %c0_i32, %c0_i32_0 : i32, i32
  }
  func.func @transform_6(%arg0: i32, %arg1: i32) -> (i32, i32) {
    %c0_i32 = arith.constant 0 : i32
    %c0_i32_0 = arith.constant 0 : i32
    %c0_i32_1 = arith.constant 0 : i32
    return %c0_i32, %c0_i32_0 : i32, i32
  }
  func.func @transform_7(%arg0: i32, %arg1: i32) -> (i32, i32) {
    %c0_i32 = arith.constant 0 : i32
    %c0_i32_0 = arith.constant 0 : i32
    %c0_i32_1 = arith.constant 0 : i32
    return %c0_i32, %c0_i32_0 : i32, i32
  }
  func.func @transform_8(%arg0: i32, %arg1: i32) -> (i32, i32) {
    %c0_i32 = arith.constant 0 : i32
    %c0_i32_0 = arith.constant 0 : i32
    return %arg0, %c0_i32 : i32, i32
  }
}

</mosaic_0001>

<llo_original>
// kernel: _milnet_call.1
$region0: #{_milnet_call.1}
  #allocation0 [shape = 'u32[]', space=smem, size = 0x4, offset = 0x4, fixed_abs, tag = 'smem constant byte address 0x4 - core index']
  #allocation1 [shape = 'u32[72,128]{1,0:T(1,128)}', space=vmem, size = 0x9000, scoped, tag = 'internal scratch']
  #allocation2 [shape = 'f32[4,1]{1,0:T(4,128)}', space=vmem, size = 0x800, scoped, tag = 'scratch operand']
  #allocation3 [shape = 'f32[4,1]{1,0:T(4,128)}', space=vmem, size = 0x800, scoped, tag = 'scratch operand']
  #allocation4 [shape = 'f32[4,256]{1,0:T(4,128)}', space=vmem, size = 0x1000, scoped, tag = 'scratch operand']
  #allocation5 [shape = 'f32[1,1]{1,0:T(1,128)S(1)}', space=vmem, size = 0x200, scoped, tag = 'scoped memory for _milnet_call.1']
  %s0 = inlined_call_operand.vmem [shape: s32[4,1], index: 0, kind: input, shape index: {}]
  %s1 = inlined_call_operand.vmem [shape: f32[4,32,256], index: 1, kind: input, shape index: {}]
  %s2 = inlined_call_operand.vmem [shape: f32[256,128], index: 2, kind: input, shape index: {}]
  %s3 = inlined_call_operand.vmem [shape: f32[1,128], index: 3, kind: input, shape index: {}]
  %s4 = inlined_call_operand.vmem [shape: f32[256,128], index: 4, kind: input, shape index: {}]
  %s5 = inlined_call_operand.vmem [shape: f32[1,128], index: 5, kind: input, shape index: {}]
  %s6 = inlined_call_operand.vmem [shape: f32[1,128], index: 6, kind: input, shape index: {}]
  %s7 = inlined_call_operand.<no memory space> [shape: f32[1,1], index: 7, kind: input, shape index: {}]
  %s8 = inlined_call_operand.hbm [shape: f32[4,256], index: 8, kind: output, shape index: {}]
  %s9 = sld [smem:[#allocation0]]
  $region96: #{_milnet_call.1} parent=0
    _
  %s11 = ssub.s32 1, %s9
  %s12 = scalar_select 0, %s11, %s9
  %v13 = vstv %s7
  %14 = vst [vmem:[#allocation5] sm:$0x1] %v13
  $region1: #{_milnet_call.1} parent=0
    #allocation6 [shape = 'u8[65536]{0}', space=vmem, size = 0x10000, scoped, tag = 'input window, operand 1']
    #allocation7 [shape = 'u8[4096]{0}', space=vmem, size = 0x1000, scoped, tag = 'output window, operand 0, single buffered']
    #allocation8 [shape = 's32[2]{0}', space=sflag, size = 0x8, scoped, tag = 'scoped memory for _milnet_call.1']
    %15 = vsyncpa [#allocation8], 0
    loop: start=0, step=1, limit=6
    $region2: #{_milnet_call.1} parent=1 // loop_pre_header
      _
    $region3: #{_milnet_call.1} parent=1 // loop_header
      %s17 = sphi 0, %s21
      %p18 = scmp.ge.s32.totalorder %s17, 6
      %s24 = sphi 0, %s36
      %s25 = sphi 0, %s32
      %s26 = sphi 0, %s24
      %s27 = sphi 0, %s25
      %s28 = sphi 0, %s26
      %s29 = sphi 0, %s27
      %s39 = sphi 0, %s41
      %s42 = sphi 0, %s39
      %s43 = sphi 0, %s42
      %s59 = sphi 0, %s43
      %s67 = sphi 0, %s69
      %s70 = sphi 0, %s67
      %s71 = sphi 0, %s70
      %s87 = sphi 0, %s71
      %s91 = sphi 0, %s91
      %s93 = sphi 0, %s91
      %s94 = sphi 0, %s93
      %s108 = sphi 0, %s94
      %s112 = sphi 0, %s112
      %s114 = sphi 0, %s112
      %s115 = sphi 0, %s114
      %s129 = sphi 0, %s115
      %s133 = sphi 0, %s133
      %s135 = sphi 0, %s133
      %s136 = sphi 0, %s135
      %s150 = sphi 0, %s136
      %s154 = sphi 0, %s154
      %s156 = sphi 0, %s154
      %s157 = sphi 0, %s156
      %s171 = sphi 0, %s157
      %s175 = sphi 0, %s175
      %s177 = sphi 0, %s175
      %s178 = sphi 0, %s177
      %s192 = sphi 0, %s178
      %s196 = sphi 0, %s196
      %s198 = sphi 0, %s196
      %s199 = sphi 0, %s198
      %s213 = sphi 0, %s199
      %s219 = sphi 0, %s221
      %s222 = sphi 0, %s219
      %s223 = sphi 0, %s222
      %s239 = sphi 0, %s223
    $region4: #{_milnet_call.1} parent=1 // loop_header_branch
      %20 = sbr.rel (%p18) target = $region8
    $region5: #{_milnet_call.1} parent=1 // loop_body
      %s22 = ssub.s32 %s17, 1
      %s23 = ssub.s32 %s17, 2
      %s30 = sadd.s32 1, %s25
      %p31 = scmp.ge.s32.totalorder %s30, 4
      %s32 = scalar_select %p31, 0, %s30
      %s33 = sadd.s32 1, %s24
      %s34 = scalar_select %p31, %s33, %s24
      %p35 = scmp.ge.s32.totalorder %s34, 1
      %s36 = scalar_select %p35, 0, %s34
      %s37 = ssub.s32 %s24, %s36
      %p38 = scmp.eq.s32.totalorder %s37, 0
      %s40 = sadd.s32 %s39, 1
      %s41 = scalar_select %p38, %s39, %s40
      %p44 = pneg %p38
      %p45 = scmp.eq.s32.totalorder %s17, 3
      %p46 = por %p44, %p45
      %p47 = scmp.ne.s32.totalorder %s39, %s42
      %p48 = scmp.eq.s32.totalorder %s17, 0
      %p49 = por %p47, %p48
      %p50 = scmp.ne.s32.totalorder %s39, %s42
      %p51 = scmp.eq.s32.totalorder %s22, 3
      %p52 = por %p50, %p51
      %p53 = scmp.ne.s32.totalorder %s42, %s43
      %p54 = scmp.eq.s32.totalorder %s22, 0
      %p55 = por %p53, %p54
      %p56 = scmp.ne.s32.totalorder %s42, %s43
      %p57 = scmp.eq.s32.totalorder %s23, 3
      %p58 = por %p56, %p57
      %p60 = scmp.ne.s32.totalorder %s43, %s59
      %p61 = scmp.eq.s32.totalorder %s23, 0
      %p62 = por %p60, %p61
      %s63 = ssub.s32 %s24, %s36
      %s64 = ssub.s32 %s25, %s32
      %s65 = sor.u32 %s63, %s64
      %p66 = scmp.eq.s32.totalorder %s65, 0
      %s68 = sadd.s32 %s67, 1
      %s69 = scalar_select %p66, %s67, %s68
      %p72 = pneg %p66
      %p73 = scmp.eq.s32.totalorder %s17, 3
      %p74 = por %p72, %p73
      %p75 = scmp.ne.s32.totalorder %s67, %s70
      %p76 = scmp.eq.s32.totalorder %s17, 0
      %p77 = por %p75, %p76
      %p78 = scmp.ne.s32.totalorder %s67, %s70
      %p79 = scmp.eq.s32.totalorder %s22, 3
      %p80 = por %p78, %p79
      %p81 = scmp.ne.s32.totalorder %s70, %s71
      %p82 = scmp.eq.s32.totalorder %s22, 0
      %p83 = por %p81, %p82
      %p84 = scmp.ne.s32.totalorder %s70, %s71
      %p85 = scmp.eq.s32.totalorder %s23, 3
      %p86 = por %p84, %p85
      %p88 = scmp.ne.s32.totalorder %s71, %s87
      %p89 = scmp.eq.s32.totalorder %s23, 0
      %p90 = por %p88, %p89
      %s92 = sadd.s32 %s91, 1
      %p95 = scmp.eq.s32.totalorder %s17, 3
      %p96 = scmp.ne.s32.totalorder %s91, %s93
      %p97 = scmp.eq.s32.totalorder %s17, 0
      %p98 = por %p96, %p97
      %p99 = scmp.ne.s32.totalorder %s91, %s93
      %p100 = scmp.eq.s32.totalorder %s22, 3
      %p101 = por %p99, %p100
      %p102 = scmp.ne.s32.totalorder %s93, %s94
      %p103 = scmp.eq.s32.totalorder %s22, 0
      %p104 = por %p102, %p103
      %p105 = scmp.ne.s32.totalorder %s93, %s94
      %p106 = scmp.eq.s32.totalorder %s23, 3
      %p107 = por %p105, %p106
      %p109 = scmp.ne.s32.totalorder %s94, %s108
      %p110 = scmp.eq.s32.totalorder %s23, 0
      %p111 = por %p109, %p110
      %s113 = sadd.s32 %s112, 1
      %p116 = scmp.eq.s32.totalorder %s17, 3
      %p117 = scmp.ne.s32.totalorder %s112, %s114
      %p118 = scmp.eq.s32.totalorder %s17, 0
      %p119 = por %p117, %p118
      %p120 = scmp.ne.s32.totalorder %s112, %s114
      %p121 = scmp.eq.s32.totalorder %s22, 3
      %p122 = por %p120, %p121
      %p123 = scmp.ne.s32.totalorder %s114, %s115
      %p124 = scmp.eq.s32.totalorder %s22, 0
      %p125 = por %p123, %p124
      %p126 = scmp.ne.s32.totalorder %s114, %s115
      %p127 = scmp.eq.s32.totalorder %s23, 3
      %p128 = por %p126, %p127
      %p130 = scmp.ne.s32.totalorder %s115, %s129
      %p131 = scmp.eq.s32.totalorder %s23, 0
      %p132 = por %p130, %p131
      %s134 = sadd.s32 %s133, 1
      %p137 = scmp.eq.s32.totalorder %s17, 3
      %p138 = scmp.ne.s32.totalorder %s133, %s135
      %p139 = scmp.eq.s32.totalorder %s17, 0
      %p140 = por %p138, %p139
      %p141 = scmp.ne.s32.totalorder %s133, %s135
      %p142 = scmp.eq.s32.totalorder %s22, 3
      %p143 = por %p141, %p142
      %p144 = scmp.ne.s32.totalorder %s135, %s136
      %p145 = scmp.eq.s32.totalorder %s22, 0
      %p146 = por %p144, %p145
      %p147 = scmp.ne.s32.totalorder %s135, %s136
      %p148 = scmp.eq.s32.totalorder %s23, 3
      %p149 = por %p147, %p148
      %p151 = scmp.ne.s32.totalorder %s136, %s150
      %p152 = scmp.eq.s32.totalorder %s23, 0
      %p153 = por %p151, %p152
      %s155 = sadd.s32 %s154, 1
      %p158 = scmp.eq.s32.totalorder %s17, 3
      %p159 = scmp.ne.s32.totalorder %s154, %s156
      %p160 = scmp.eq.s32.totalorder %s17, 0
      %p161 = por %p159, %p160
      %p162 = scmp.ne.s32.totalorder %s154, %s156
      %p163 = scmp.eq.s32.totalorder %s22, 3
      %p164 = por %p162, %p163
      %p165 = scmp.ne.s32.totalorder %s156, %s157
      %p166 = scmp.eq.s32.totalorder %s22, 0
      %p167 = por %p165, %p166
      %p168 = scmp.ne.s32.totalorder %s156, %s157
      %p169 = scmp.eq.s32.totalorder %s23, 3
      %p170 = por %p168, %p169
      %p172 = scmp.ne.s32.totalorder %s157, %s171
      %p173 = scmp.eq.s32.totalorder %s23, 0
      %p174 = por %p172, %p173
      %s176 = sadd.s32 %s175, 1
      %p179 = scmp.eq.s32.totalorder %s17, 3
      %p180 = scmp.ne.s32.totalorder %s175, %s177
      %p181 = scmp.eq.s32.totalorder %s17, 0
      %p182 = por %p180, %p181
      %p183 = scmp.ne.s32.totalorder %s175, %s177
      %p184 = scmp.eq.s32.totalorder %s22, 3
      %p185 = por %p183, %p184
      %p186 = scmp.ne.s32.totalorder %s177, %s178
      %p187 = scmp.eq.s32.totalorder %s22, 0
      %p188 = por %p186, %p187
      %p189 = scmp.ne.s32.totalorder %s177, %s178
      %p190 = scmp.eq.s32.totalorder %s23, 3
      %p191 = por %p189, %p190
      %p193 = scmp.ne.s32.totalorder %s178, %s192
      %p194 = scmp.eq.s32.totalorder %s23, 0
      %p195 = por %p193, %p194
      %s197 = sadd.s32 %s196, 1
      %p200 = scmp.eq.s32.totalorder %s17, 3
      %p201 = scmp.ne.s32.totalorder %s196, %s198
      %p202 = scmp.eq.s32.totalorder %s17, 0
      %p203 = por %p201, %p202
      %p204 = scmp.ne.s32.totalorder %s196, %s198
      %p205 = scmp.eq.s32.totalorder %s22, 3
      %p206 = por %p204, %p205
      %p207 = scmp.ne.s32.totalorder %s198, %s199
      %p208 = scmp.eq.s32.totalorder %s22, 0
      %p209 = por %p207, %p208
      %p210 = scmp.ne.s32.totalorder %s198, %s199
      %p211 = scmp.eq.s32.totalorder %s23, 3
      %p212 = por %p210, %p211
      %p214 = scmp.ne.s32.totalorder %s199, %s213
      %p215 = scmp.eq.s32.totalorder %s23, 0
      %p216 = por %p214, %p215
      %s217 = ssub.s32 %s24, %s36
      %p218 = scmp.eq.s32.totalorder %s217, 0
      %s220 = sadd.s32 %s219, 1
      %s221 = scalar_select %p218, %s219, %s220
      %p224 = pneg %p218
      %p225 = scmp.eq.s32.totalorder %s17, 3
      %p226 = por %p224, %p225
      %p227 = scmp.ne.s32.totalorder %s219, %s222
      %p228 = scmp.eq.s32.totalorder %s17, 0
      %p229 = por %p227, %p228
      %p230 = scmp.ne.s32.totalorder %s219, %s222
      %p231 = scmp.eq.s32.totalorder %s22, 3
      %p232 = por %p230, %p231
      %p233 = scmp.ne.s32.totalorder %s222, %s223
      %p234 = scmp.eq.s32.totalorder %s22, 0
      %p235 = por %p233, %p234
      %p236 = scmp.ne.s32.totalorder %s222, %s223
      %p237 = scmp.eq.s32.totalorder %s23, 3
      %p238 = por %p236, %p237
      %p240 = scmp.ne.s32.totalorder %s223, %s239
      %p241 = scmp.eq.s32.totalorder %s23, 0
      %p242 = por %p240, %p241
      %p243 = scmp.le.s32.totalorder 1, %s17
      %p244 = scmp.lt.s32.totalorder %s17, 5
      %p245 = pnand %p243, %p244
      %p246 = pneg %p245
      // Predicated region
      $region9: #{_milnet_call.1} parent=5 // pred_check
        _
      $region10: #{_milnet_call.1} parent=5 // pred_check_branch
        %248 = sbr.rel (%p245) target = $region12
      $region11: #{_milnet_call.1} parent=5 // pred_region
        %s249 = ssub.s32 %s17, 1
        // Predicated region
        $region13: #{_milnet_call.1} parent=11 // pred_check
          %p250 = pneg %p55
        $region14: #{_milnet_call.1} parent=11 // pred_check_branch
          %252 = sbr.rel (%p250) target = $region16
        $region15: #{_milnet_call.1} parent=11 // pred_region
          %p253 = scmp.lt.s32.totalorder %s26, 0
          %s254 = scalar_select %p253, %s26, 0
          %s255 = smul.addr %s254, 4
          %s256 = scalar_lea.vmem %s0, %s255
        $region16: #{_milnet_call.1} parent=11 // pred_fallthru
          _
        // Predicated region
        $region17: #{_milnet_call.1} parent=11 // pred_check
          %p257 = pneg %p104
        $region18: #{_milnet_call.1} parent=11 // pred_check_branch
          %259 = sbr.rel (%p257) target = $region20
        $region19: #{_milnet_call.1} parent=11 // pred_region
          _
        $region20: #{_milnet_call.1} parent=11 // pred_fallthru
          _
        // Predicated region
        $region21: #{_milnet_call.1} parent=11 // pred_check
          %p260 = pneg %p125
        $region22: #{_milnet_call.1} parent=11 // pred_check_branch
          %262 = sbr.rel (%p260) target = $region24
        $region23: #{_milnet_call.1} parent=11 // pred_region
          _
        $region24: #{_milnet_call.1} parent=11 // pred_fallthru
          _
        // Predicated region
        $region25: #{_milnet_call.1} parent=11 // pred_check
          %p263 = pneg %p146
        $region26: #{_milnet_call.1} parent=11 // pred_check_branch
          %265 = sbr.rel (%p263) target = $region28
        $region27: #{_milnet_call.1} parent=11 // pred_region
          _
        $region28: #{_milnet_call.1} parent=11 // pred_fallthru
          _
        // Predicated region
        $region29: #{_milnet_call.1} parent=11 // pred_check
          %p266 = pneg %p167
        $region30: #{_milnet_call.1} parent=11 // pred_check_branch
          %268 = sbr.rel (%p266) target = $region32
        $region31: #{_milnet_call.1} parent=11 // pred_region
          _
        $region32: #{_milnet_call.1} parent=11 // pred_fallthru
          _
        // Predicated region
        $region33: #{_milnet_call.1} parent=11 // pred_check
          %p269 = pneg %p188
        $region34: #{_milnet_call.1} parent=11 // pred_check_branch
          %271 = sbr.rel (%p269) target = $region36
        $region35: #{_milnet_call.1} parent=11 // pred_region
          _
        $region36: #{_milnet_call.1} parent=11 // pred_fallthru
          _
        // Predicated region
        $region37: #{_milnet_call.1} parent=11 // pred_check
          %p272 = pneg %p209
        $region38: #{_milnet_call.1} parent=11 // pred_check_branch
          %274 = sbr.rel (%p272) target = $region40
        $region39: #{_milnet_call.1} parent=11 // pred_region
          _
        $region40: #{_milnet_call.1} parent=11 // pred_fallthru
          _
      $region12: #{_milnet_call.1} parent=5 // pred_fallthru
        _
      %p275 = scmp.lt.s32.totalorder %s17, 4
      // Predicated region
      $region41: #{_milnet_call.1} parent=5 // pred_check
        %p276 = pneg %p275
      $region42: #{_milnet_call.1} parent=5 // pred_check_branch
        %278 = sbr.rel (%p276) target = $region44
      $region43: #{_milnet_call.1} parent=5 // pred_region
        // Predicated region
        $region45: #{_milnet_call.1} parent=43 // pred_check
          %p279 = pneg %p77
        $region46: #{_milnet_call.1} parent=43 // pred_check_branch
          %281 = sbr.rel (%p279) target = $region48
        $region47: #{_milnet_call.1} parent=43 // pred_region
          %s282 = sand.u32 %s67, 1
          %s283 = sand.u32 %s67, 1
          %s284 = smul.addr %s283, 64
          %s285 = scalar_lea.vmem [#allocation6], %s284
          %s286 = smul.u32 4, %s24
          %s287 = smul.addr %s25, 2
          %s288 = smul.addr %s286, 8
          %s289 = sadd.s32 %s287, %s288
          %s290 = smul.addr %s289, 8
          %s291 = scalar_lea.vmem %s1, %s290
          // Predicated region
          $region49: #{_milnet_call.1} parent=47 // pred_check
            _
          $region50: #{_milnet_call.1} parent=47 // pred_check_branch
            %293 = sbr.rel (0) target = $region52
          $region51: #{_milnet_call.1} parent=47 // pred_region
            // Predicated region
            $region53: #{_milnet_call.1} parent=51 // pred_check
              _
            $region54: #{_milnet_call.1} parent=51 // pred_check_branch
              %295 = sbr.rel (0) target = $region56
            $region55: #{_milnet_call.1} parent=51 // pred_region
              loop: start=0, step=1, limit=1
              $region57: #{_milnet_call.1} parent=55 // loop_pre_header
                _
              $region58: #{_milnet_call.1} parent=55 // loop_header
                %s297 = sphi 0, %s301
                %p298 = scmp.ge.s32.totalorder %s297, 1
                %s302 = sphi %s291, %s291
                %s303 = sphi %s285, %s285
              $region59: #{_milnet_call.1} parent=55 // loop_header_branch
                %300 = sbr.rel (%p298) target = $region63
              $region60: #{_milnet_call.1} parent=55 // loop_body
                %v304 = vld [vmem:[%s302] sm:$0xff]
                %305 = vst [vmem:[%s303] sm:$0xff] %v304
                %v306 = vld [vmem:[%s302 + $0x8] sm:$0xff]
                %307 = vst [vmem:[%s303 + $0x8] sm:$0xff] %v306
                %v308 = vld [vmem:[%s302 + $0x40] sm:$0xff]
                %309 = vst [vmem:[%s303 + $0x10] sm:$0xff] %v308
                %v310 = vld [vmem:[%s302 + $0x48] sm:$0xff]
                %311 = vst [vmem:[%s303 + $0x18] sm:$0xff] %v310
                %v312 = vld [vmem:[%s302 + $0x80] sm:$0xff]
                %313 = vst [vmem:[%s303 + $0x20] sm:$0xff] %v312
                %v314 = vld [vmem:[%s302 + $0x88] sm:$0xff]
                %315 = vst [vmem:[%s303 + $0x28] sm:$0xff] %v314
                %v316 = vld [vmem:[%s302 + $0xc0] sm:$0xff]
                %317 = vst [vmem:[%s303 + $0x30] sm:$0xff] %v316
                %v318 = vld [vmem:[%s302 + $0xc8] sm:$0xff]
                %319 = vst [vmem:[%s303 + $0x38] sm:$0xff] %v318
              $region61: #{_milnet_call.1} parent=55 // loop_footer
                %s301 = sadd.s32 1, %s297
              $region62: #{_milnet_call.1} parent=55 // loop_footer_branch
                %296 = sbr.rel target = $region58
              $region63: #{_milnet_call.1} parent=55 // loop_exit
                _
            $region56: #{_milnet_call.1} parent=51 // pred_fallthru
              _
            // Predicated region
            $region64: #{_milnet_call.1} parent=51 // pred_check
              _
            $region65: #{_milnet_call.1} parent=51 // pred_check_branch
              %321 = sbr.rel target = $region67
            $region66: #{_milnet_call.1} parent=51 // pred_region
              _
            $region67: #{_milnet_call.1} parent=51 // pred_fallthru
              _
          $region52: #{_milnet_call.1} parent=47 // pred_fallthru
            _
          %322 = vnop
        $region48: #{_milnet_call.1} parent=43 // pred_fallthru
          _
      $region44: #{_milnet_call.1} parent=5 // pred_fallthru
        _
      %p323 = scmp.le.s32.totalorder 1, %s17
      %p324 = scmp.lt.s32.totalorder %s17, 5
      %p325 = pnand %p323, %p324
      %p326 = pneg %p325
      // Predicated region
      $region68: #{_milnet_call.1} parent=5 // pred_check
        _
      $region69: #{_milnet_call.1} parent=5 // pred_check_branch
        %328 = sbr.rel (%p325) target = $region71
      $region70: #{_milnet_call.1} parent=5 // pred_region
        %s329 = ssub.s32 %s17, 1
        %s330 = sand.u32 %s70, 1
        %s331 = sand.u32 %s70, 1
        %s332 = smul.addr %s331, 64
        %s333 = scalar_lea.vmem [#allocation6], %s332
        // Predicated region
        $region72: #{_milnet_call.1} parent=70 // pred_check
          %p334 = pneg %p83
        $region73: #{_milnet_call.1} parent=70 // pred_check_branch
          %336 = sbr.rel (%p334) target = $region75
        $region74: #{_milnet_call.1} parent=70 // pred_region
          _
        $region75: #{_milnet_call.1} parent=70 // pred_fallthru
          _
        %p337 = scmp.lt.s32.totalorder %s26, 0
        %s338 = scalar_select %p337, %s26, 0
        %s339 = smul.addr %s338, 4
        %s340 = scalar_lea.vmem %s0, %s339
        %p341 = pneg %p55
        %p342 = pneg %p52
        %s343 = sand.u32 %s70, 1
        %s344 = sand.u32 %s70, 1
        %s345 = smul.addr %s344, 64
        %s346 = scalar_lea.vmem [#allocation6], %s345
        %p347 = pneg %p83
        %p348 = pneg %p80
        %p349 = pneg %p104
        %p350 = pneg %p101
        %p351 = pneg %p125
        %p352 = pneg %p122
        %p353 = pneg %p146
        %p354 = pneg %p143
        %p355 = pneg %p167
        %p356 = pneg %p164
        %p357 = pneg %p188
        %p358 = pneg %p185
        %p359 = pneg %p209
        %p360 = pneg %p206
        %p361 = pneg %p235
        %p362 = pneg %p232
        %p363 = scmp.lt.s32.totalorder %s26, 0
        %s364 = scalar_select %p363, %s26, 0
        %s365 = smul.addr %s364, 4
        %s366 = scalar_lea.vmem %s0, %s365
        %s367 = smul.u32 4, %s26
        %p368 = scmp.eq.s32.totalorder %s27, 0
        // Predicated region
        $region76: #{_milnet_call.1} parent=70 // pred_check
          %p369 = pneg %p368
        $region77: #{_milnet_call.1} parent=70 // pred_check_branch
          %371 = sbr.rel (%p369) target = $region79
        $region78: #{_milnet_call.1} parent=70 // pred_region
          %vm372 = vcmask 3072
          %373 = vst.msk [vmem:[#allocation2] sm:$0xf] %vm372, -1e+30
          %374 = vst.msk [vmem:[#allocation3] sm:$0xf] %vm372, 0.0
          %375 = vst [vmem:[#allocation4] sm:$0xff] 0.0
        $region79: #{_milnet_call.1} parent=70 // pred_fallthru
          _
        %v376 = vld [vmem:[%s2] sm:$0xff]
        %v377 = vld [vmem:[%s2 + $0x8] sm:$0xff]
        %v378 = vld [vmem:[%s2 + $0x10] sm:$0xff]
        %v379 = vld [vmem:[%s2 + $0x18] sm:$0xff]
        %v380 = vld [vmem:[%s2 + $0x20] sm:$0xff]
        %v381 = vld [vmem:[%s2 + $0x28] sm:$0xff]
        %v382 = vld [vmem:[%s2 + $0x30] sm:$0xff]
        %v383 = vld [vmem:[%s2 + $0x38] sm:$0xff]
        %v384 = vld [vmem:[%s2 + $0x40] sm:$0xff]
        %v385 = vld [vmem:[%s2 + $0x48] sm:$0xff]
        %v386 = vld [vmem:[%s2 + $0x50] sm:$0xff]
        %v387 = vld [vmem:[%s2 + $0x58] sm:$0xff]
        %v388 = vld [vmem:[%s2 + $0x60] sm:$0xff]
        %v389 = vld [vmem:[%s2 + $0x68] sm:$0xff]
        %v390 = vld [vmem:[%s2 + $0x70] sm:$0xff]
        %v391 = vld [vmem:[%s2 + $0x78] sm:$0xff]
        %v392 = vld [vmem:[%s2 + $0x80] sm:$0xff]
        %v393 = vld [vmem:[%s2 + $0x88] sm:$0xff]
        %v394 = vld [vmem:[%s2 + $0x90] sm:$0xff]
        %v395 = vld [vmem:[%s2 + $0x98] sm:$0xff]
        %v396 = vld [vmem:[%s2 + $0xa0] sm:$0xff]
        %v397 = vld [vmem:[%s2 + $0xa8] sm:$0xff]
        %v398 = vld [vmem:[%s2 + $0xb0] sm:$0xff]
        %v399 = vld [vmem:[%s2 + $0xb8] sm:$0xff]
        %v400 = vld [vmem:[%s2 + $0xc0] sm:$0xff]
        %v401 = vld [vmem:[%s2 + $0xc8] sm:$0xff]
        %v402 = vld [vmem:[%s2 + $0xd0] sm:$0xff]
        %v403 = vld [vmem:[%s2 + $0xd8] sm:$0xff]
        %v404 = vld [vmem:[%s2 + $0xe0] sm:$0xff]
        %v405 = vld [vmem:[%s2 + $0xe8] sm:$0xff]
        %v406 = vld [vmem:[%s2 + $0xf0] sm:$0xff]
        %v407 = vld [vmem:[%s2 + $0xf8] sm:$0xff]
        %v408 = vld [vmem:[%s4] sm:$0xff]
        %v409 = vld [vmem:[%s4 + $0x8] sm:$0xff]
        %v410 = vld [vmem:[%s4 + $0x10] sm:$0xff]
        %v411 = vld [vmem:[%s4 + $0x18] sm:$0xff]
        %v412 = vld [vmem:[%s4 + $0x20] sm:$0xff]
        %v413 = vld [vmem:[%s4 + $0x28] sm:$0xff]
        %v414 = vld [vmem:[%s4 + $0x30] sm:$0xff]
        %v415 = vld [vmem:[%s4 + $0x38] sm:$0xff]
        %v416 = vld [vmem:[%s4 + $0x40] sm:$0xff]
        %v417 = vld [vmem:[%s4 + $0x48] sm:$0xff]
        %v418 = vld [vmem:[%s4 + $0x50] sm:$0xff]
        %v419 = vld [vmem:[%s4 + $0x58] sm:$0xff]
        %v420 = vld [vmem:[%s4 + $0x60] sm:$0xff]
        %v421 = vld [vmem:[%s4 + $0x68] sm:$0xff]
        %v422 = vld [vmem:[%s4 + $0x70] sm:$0xff]
        %v423 = vld [vmem:[%s4 + $0x78] sm:$0xff]
        %v424 = vld [vmem:[%s4 + $0x80] sm:$0xff]
        %v425 = vld [vmem:[%s4 + $0x88] sm:$0xff]
        %v426 = vld [vmem:[%s4 + $0x90] sm:$0xff]
        %v427 = vld [vmem:[%s4 + $0x98] sm:$0xff]
        %v428 = vld [vmem:[%s4 + $0xa0] sm:$0xff]
        %v429 = vld [vmem:[%s4 + $0xa8] sm:$0xff]
        %v430 = vld [vmem:[%s4 + $0xb0] sm:$0xff]
        %v431 = vld [vmem:[%s4 + $0xb8] sm:$0xff]
        %v432 = vld [vmem:[%s4 + $0xc0] sm:$0xff]
        %v433 = vld [vmem:[%s4 + $0xc8] sm:$0xff]
        %v434 = vld [vmem:[%s4 + $0xd0] sm:$0xff]
        %v435 = vld [vmem:[%s4 + $0xd8] sm:$0xff]
        %v436 = vld [vmem:[%s4 + $0xe0] sm:$0xff]
        %v437 = vld [vmem:[%s4 + $0xe8] sm:$0xff]
        %v438 = vld [vmem:[%s4 + $0xf0] sm:$0xff]
        %v439 = vld [vmem:[%s4 + $0xf8] sm:$0xff]
        %v440 = vld [vmem:[%s3] sm:$0x1]
        %v441 = vld [vmem:[%s5] sm:$0x1]
        %v442 = vld [vmem:[%s6] sm:$0x1]
        %v443 = vld [vmem:[#allocation5] sm:$0x1]
        %s444 = smul.u32 %s27, 8
        %v445 = vlaneseq
        %v446 = vshrl.u32 %v445, 7
        %v447 = vld [vmem:[%s333] sm:$0xff]
        %v448 = vld [vmem:[%s333 + $0x8] sm:$0xff]
        %v450 = vperm.slane %v440, 0
        %452 = vmatpush.msra.mxu0 %v391
        %453 = vmatpush.msra.mxu0 %v390
        %454 = vmatpush.msra.mxu0 %v389
        %455 = vmatpush.msra.mxu0 %v388
        %456 = vmatpush.msra.mxu0 %v387
        %457 = vmatpush.msra.mxu0 %v386
        %458 = vmatpush.msra.mxu0 %v385
        %459 = vmatpush.msra.mxu0 %v384
        %460 = vmatpush.msra.mxu0 %v383
        %461 = vmatpush.msra.mxu0 %v382
        %462 = vmatpush.msra.mxu0 %v381
        %463 = vmatpush.msra.mxu0 %v380
        %464 = vmatpush.msra.mxu0 %v379
        %465 = vmatpush.msra.mxu0 %v378
        %466 = vmatpush.msra.mxu0 %v377
        %467 = vmatpush.msra.mxu0 %v376
        %468 = vmatmul.f32.gmra.mxu0 %v447
        %v469 = vpop.f32.mrf.mxu0
        %v470 = vadd.f32 %v450, %v469
        %471 = vdwg.mxu0
        %472 = vmatpush.msra.mxu0 %v407
        %473 = vmatpush.msra.mxu0 %v406
        %474 = vmatpush.msra.mxu0 %v405
        %475 = vmatpush.msra.mxu0 %v404
        %476 = vmatpush.msra.mxu0 %v403
        %477 = vmatpush.msra.mxu0 %v402
        %478 = vmatpush.msra.mxu0 %v401
        %479 = vmatpush.msra.mxu0 %v400
        %480 = vmatpush.msra.mxu0 %v399
        %481 = vmatpush.msra.mxu0 %v398
        %482 = vmatpush.msra.mxu0 %v397
        %483 = vmatpush.msra.mxu0 %v396
        %484 = vmatpush.msra.mxu0 %v395
        %485 = vmatpush.msra.mxu0 %v394
        %486 = vmatpush.msra.mxu0 %v393
        %487 = vmatpush.msra.mxu0 %v392
        %488 = vmatmul.f32.gmra.mxu0 %v448
        %v489 = vpop.f32.mrf.mxu0
        %v490 = vadd.f32 %v470, %v489
        %491 = vdwg.mxu0
        %v492 = vtanh.pop %v490
        %v494 = vperm.slane %v441, 0
        %496 = vmatpush.msra.mxu0 %v423
        %497 = vmatpush.msra.mxu0 %v422
        %498 = vmatpush.msra.mxu0 %v421
        %499 = vmatpush.msra.mxu0 %v420
        %500 = vmatpush.msra.mxu0 %v419
        %501 = vmatpush.msra.mxu0 %v418
        %502 = vmatpush.msra.mxu0 %v417
        %503 = vmatpush.msra.mxu0 %v416
        %504 = vmatpush.msra.mxu0 %v415
        %505 = vmatpush.msra.mxu0 %v414
        %506 = vmatpush.msra.mxu0 %v413
        %507 = vmatpush.msra.mxu0 %v412
        %508 = vmatpush.msra.mxu0 %v411
        %509 = vmatpush.msra.mxu0 %v410
        %510 = vmatpush.msra.mxu0 %v409
        %511 = vmatpush.msra.mxu0 %v408
        %512 = vmatmul.f32.gmra.mxu0 %v447
        %v513 = vpop.f32.mrf.mxu0
        %v514 = vadd.f32 %v494, %v513
        %515 = vdwg.mxu0
        %516 = vmatpush.msra.mxu0 %v439
        %517 = vmatpush.msra.mxu0 %v438
        %518 = vmatpush.msra.mxu0 %v437
        %519 = vmatpush.msra.mxu0 %v436
        %520 = vmatpush.msra.mxu0 %v435
        %521 = vmatpush.msra.mxu0 %v434
        %522 = vmatpush.msra.mxu0 %v433
        %523 = vmatpush.msra.mxu0 %v432
        %524 = vmatpush.msra.mxu0 %v431
        %525 = vmatpush.msra.mxu0 %v430
        %526 = vmatpush.msra.mxu0 %v429
        %527 = vmatpush.msra.mxu0 %v428
        %528 = vmatpush.msra.mxu0 %v427
        %529 = vmatpush.msra.mxu0 %v426
        %530 = vmatpush.msra.mxu0 %v425
        %531 = vmatpush.msra.mxu0 %v424
        %532 = vmatmul.f32.gmra.mxu0 %v448
        %v533 = vpop.f32.mrf.mxu0
        %v534 = vadd.f32 %v514, %v533
        %535 = vdwg.mxu0
        %v536 = vxor.u32 %v534, 2147483648
        %v537 = vmul.f32 %v536, 1.442695
        %v538 = vpow.pop %v537
        %v539 = vadd.f32 %v538, 1.0
        %v540 = vrcp.pop %v539
        %v541 = vmul.f32 %v539, %v540
        %v542 = vsub.f32 1.0, %v541
        %v543 = vmul.f32 %v540, %v542
        %v544 = vadd.f32 %v540, %v543
        %vm545 = vweird.f32 %v539
        %vm546 = vweird.f32 %v540
        %vm547 = vmor %vm545, %vm546
        %v548 = vsel %vm547, %v540, %v544
        %v549 = vand.u32 2147483647, %v539
        %vm550 = vcmp.eq.f32.partialorder %v549, 8.507059e+37
        %v551 = vand.u32 %v539, 2147483648
        %v552 = vor.u32 1.1754944e-38, %v551
        %v553 = vsel %vm550, %v552, %v548
        %v554 = vmul.f32 1.0, %v553
        %v555 = vmul.f32 %v492, %v554
        %v557 = vperm.slane %v442, 0
        %v559 = vmul.f32 %v555, %v557
        %560 = vadd.xlane.f32.xlu0 %v559
        %v561 = vpop.xlane.xlu0 %560
        %v563 = vperm.slane %v443, 0
        %v565 = vadd.f32 %v561, %v563
        %v566 = vstv %s444
        %v567 = vadd.s32 %v566, %v446
        %v568 = vld [vmem:[%s366] sm:$0x1]
        %v569 = vperm.slane %v568, 0
        %vm570 = vcmp.lt.s32.totalorder %v567, %v569
        %v571 = vld [vmem:[#allocation2] sm:$0x1]
        %v572 = vsel %vm570, %v565, -1e+30
        %vm573 = vcmask 7168
        %v574 = vsel %vm573, %v572, -inf
        %575 = vmax.xlane.f32.xlu0 %v574
        %v576 = vpop.xlane.xlu0 %575
        %v577 = vrot.slane %v576, 4
        %v578 = vmax.f32 %v576, %v577
        %v579 = vrot.slane %v578, 2
        %v580 = vmax.f32 %v578, %v579
        %v581 = vrot.slane %v580, 1
        %v582 = vmax.f32 %v580, %v581
        %s583 = vtos %v582
        %v584 = vstv %s583
        %v585 = vmax.f32 %v571, %v584
        %v586 = vsub.f32 %v571, %v585
        %v587 = vmul.f32 %v586, 1.442695
        %v588 = vpow.pop %v587
        %v589 = vperm.slane %v585, 0
        %v590 = vsub.f32 %v565, %v589
        %v591 = vmul.f32 %v590, 1.442695
        %v592 = vpow.pop %v591
        %v593 = vsel %vm570, %v592, 0.0
        %v594 = vld [vmem:[#allocation3] sm:$0x1]
        %v595 = vmul.f32 %v588, %v594
        %v596 = vsel %vm573, %v593, 0.0
        %597 = vadd.xlane.f32.xlu0 %v596
        %v598 = vpop.xlane.xlu0 %597
        %v599 = vrot.slane %v598, 4
        %v600 = vadd.f32 %v598, %v599
        %v601 = vrot.slane %v600, 2
        %v602 = vadd.f32 %v600, %v601
        %v603 = vrot.slane %v602, 1
        %v604 = vadd.f32 %v602, %v603
        %s605 = vtos %v604
        %v606 = vstv %s605
        %v607 = vadd.f32 %v595, %v606
        %vm608 = vcmask 0
        %609 = vst.msk [vmem:[#allocation3] sm:$0x1] %vm608, %v607
        %610 = vxpose.xlu0.b32.start [1/16] %v593, 128
        %611 = vxpose.xlu0.b32.cont [2/16] 0.0, 128
        %612 = vxpose.xlu0.b32.cont [3/16] 0.0, 128
        %613 = vxpose.xlu0.b32.cont [4/16] 0.0, 128
        %614 = vxpose.xlu0.b32.cont [5/16] 0.0, 128
        %615 = vxpose.xlu0.b32.cont [6/16] 0.0, 128
        %616 = vxpose.xlu0.b32.cont [7/16] 0.0, 128
        %617 = vxpose.xlu0.b32.cont [8/16] 0.0, 128
        %618 = vxpose.xlu0.b32.cont [9/16] 0.0, 128
        %619 = vxpose.xlu0.b32.cont [10/16] 0.0, 128
        %620 = vxpose.xlu0.b32.cont [11/16] 0.0, 128
        %621 = vxpose.xlu0.b32.cont [12/16] 0.0, 128
        %622 = vxpose.xlu0.b32.cont [13/16] 0.0, 128
        %623 = vxpose.xlu0.b32.cont [14/16] 0.0, 128
        %624 = vxpose.xlu0.b32.cont [15/16] 0.0, 128
        %625 = vxpose.xlu0.b32.end [16/16] 0.0, 128
        %v626 = vpop.trf.xlu0
        %v627 = vpop.trf.xlu0
        %v628 = vpop.trf.xlu0
        %v629 = vpop.trf.xlu0
        %v630 = vpop.trf.xlu0
        %v631 = vpop.trf.xlu0
        %v632 = vpop.trf.xlu0
        %v633 = vpop.trf.xlu0
        %v634 = vpop.trf.xlu0
        %v635 = vpop.trf.xlu0
        %v636 = vpop.trf.xlu0
        %v637 = vpop.trf.xlu0
        %v638 = vpop.trf.xlu0
        %v639 = vpop.trf.xlu0
        %v640 = vpop.trf.xlu0
        %v641 = vpop.trf.xlu0
        %vm642 = vcmask 64512
        %v644 = vsel %vm642, %v626, 0
        %646 = vmatpush.msra.mxu0 0.0
        %647 = vmatpush.msra.mxu0 0.0
        %648 = vmatpush.msra.mxu0 0.0
        %649 = vmatpush.msra.mxu0 0.0
        %650 = vmatpush.msra.mxu0 0.0
        %651 = vmatpush.msra.mxu0 0.0
        %652 = vmatpush.msra.mxu0 0.0
        %653 = vmatpush.msra.mxu0 0.0
        %654 = vmatpush.msra.mxu0 0.0
        %655 = vmatpush.msra.mxu0 0.0
        %656 = vmatpush.msra.mxu0 0.0
        %657 = vmatpush.msra.mxu0 0.0
        %658 = vmatpush.msra.mxu0 0.0
        %659 = vmatpush.msra.mxu0 0.0
        %660 = vmatpush.msra.mxu0 0.0
        %661 = vmatpush.msra.mxu0 %v447
        %662 = vmatmul.f32.gmra.mxu0 %v644
        %v663 = vpop.f32.mrf.mxu0
        %v664 = vadd.f32 0.0, %v663
        %665 = vdwg.mxu0
        %666 = vmatpush.msra.mxu0 0.0
        %667 = vmatpush.msra.mxu0 0.0
        %668 = vmatpush.msra.mxu0 0.0
        %669 = vmatpush.msra.mxu0 0.0
        %670 = vmatpush.msra.mxu0 0.0
        %671 = vmatpush.msra.mxu0 0.0
        %672 = vmatpush.msra.mxu0 0.0
        %673 = vmatpush.msra.mxu0 0.0
        %674 = vmatpush.msra.mxu0 0.0
        %675 = vmatpush.msra.mxu0 0.0
        %676 = vmatpush.msra.mxu0 0.0
        %677 = vmatpush.msra.mxu0 0.0
        %678 = vmatpush.msra.mxu0 0.0
        %679 = vmatpush.msra.mxu0 0.0
        %680 = vmatpush.msra.mxu0 0.0
        %681 = vmatpush.msra.mxu0 %v448
        %682 = vmatmul.f32.gmra.mxu0 %v644
        %v683 = vpop.f32.mrf.mxu0
        %v684 = vadd.f32 0.0, %v683
        %685 = vdwg.mxu0
        %v686 = vld [vmem:[#allocation4] ss:$4 sm:$0x3]
        %688 = vset.pattern.permute.xlu0 0
        %689 = vperm.xlu0 %688, %v588
        %v690 = vpop.permute.xlu0 %689
        %v693 = vperm.slane %v686, 0
        %v694 = vperm.slane %v686, 1
        %v697 = vmul.f32 %v690, %v693
        %v698 = vmul.f32 %v690, %v694
        %v699 = vadd.f32 %v697, %v664
        %v700 = vadd.f32 %v698, %v684
        %v703 = vrot.slane %v700, 7
        %vm704 = vcmask 1040384
        %v705 = vsel %vm704, %v699, %v703
        %v707 = vlaneseq
        %vm708 = vcmp.ge.s32.totalorder %v707, 0
        %vm709 = vcmp.lt.s32.totalorder %v707, 256
        %vm710 = vmand %vm708, %vm709
        %711 = vst.msk [vmem:[#allocation4] ss:$4 sm:$0x3] %vm710, %v705
        %712 = vst.msk [vmem:[#allocation2] sm:$0x1] %vm608, %v585
        %s713 = scalar_lea.vmem %s333, 16 [#allocation6]
        %v714 = vld [vmem:[%s713] sm:$0xff]
        %v715 = vld [vmem:[%s713 + $0x8] sm:$0xff]
        %716 = vmatpush.msra.mxu0 %v391
        %717 = vmatpush.msra.mxu0 %v390
        %718 = vmatpush.msra.mxu0 %v389
        %719 = vmatpush.msra.mxu0 %v388
        %720 = vmatpush.msra.mxu0 %v387
        %721 = vmatpush.msra.mxu0 %v386
        %722 = vmatpush.msra.mxu0 %v385
        %723 = vmatpush.msra.mxu0 %v384
        %724 = vmatpush.msra.mxu0 %v383
        %725 = vmatpush.msra.mxu0 %v382
        %726 = vmatpush.msra.mxu0 %v381
        %727 = vmatpush.msra.mxu0 %v380
        %728 = vmatpush.msra.mxu0 %v379
        %729 = vmatpush.msra.mxu0 %v378
        %730 = vmatpush.msra.mxu0 %v377
        %731 = vmatpush.msra.mxu0 %v376
        %732 = vmatmul.f32.gmra.mxu0 %v714
        %v733 = vpop.f32.mrf.mxu0
        %v734 = vadd.f32 %v450, %v733
        %735 = vdwg.mxu0
        %736 = vmatpush.msra.mxu0 %v407
        %737 = vmatpush.msra.mxu0 %v406
        %738 = vmatpush.msra.mxu0 %v405
        %739 = vmatpush.msra.mxu0 %v404
        %740 = vmatpush.msra.mxu0 %v403
        %741 = vmatpush.msra.mxu0 %v402
        %742 = vmatpush.msra.mxu0 %v401
        %743 = vmatpush.msra.mxu0 %v400
        %744 = vmatpush.msra.mxu0 %v399
        %745 = vmatpush.msra.mxu0 %v398
        %746 = vmatpush.msra.mxu0 %v397
        %747 = vmatpush.msra.mxu0 %v396
        %748 = vmatpush.msra.mxu0 %v395
        %749 = vmatpush.msra.mxu0 %v394
        %750 = vmatpush.msra.mxu0 %v393
        %751 = vmatpush.msra.mxu0 %v392
        %752 = vmatmul.f32.gmra.mxu0 %v715
        %v753 = vpop.f32.mrf.mxu0
        %v754 = vadd.f32 %v734, %v753
        %755 = vdwg.mxu0
        %v756 = vtanh.pop %v754
        %757 = vmatpush.msra.mxu0 %v423
        %758 = vmatpush.msra.mxu0 %v422
        %759 = vmatpush.msra.mxu0 %v421
        %760 = vmatpush.msra.mxu0 %v420
        %761 = vmatpush.msra.mxu0 %v419
        %762 = vmatpush.msra.mxu0 %v418
        %763 = vmatpush.msra.mxu0 %v417
        %764 = vmatpush.msra.mxu0 %v416
        %765 = vmatpush.msra.mxu0 %v415
        %766 = vmatpush.msra.mxu0 %v414
        %767 = vmatpush.msra.mxu0 %v413
        %768 = vmatpush.msra.mxu0 %v412
        %769 = vmatpush.msra.mxu0 %v411
        %770 = vmatpush.msra.mxu0 %v410
        %771 = vmatpush.msra.mxu0 %v409
        %772 = vmatpush.msra.mxu0 %v408
        %773 = vmatmul.f32.gmra.mxu0 %v714
        %v774 = vpop.f32.mrf.mxu0
        %v775 = vadd.f32 %v494, %v774
        %776 = vdwg.mxu0
        %777 = vmatpush.msra.mxu0 %v439
        %778 = vmatpush.msra.mxu0 %v438
        %779 = vmatpush.msra.mxu0 %v437
        %780 = vmatpush.msra.mxu0 %v436
        %781 = vmatpush.msra.mxu0 %v435
        %782 = vmatpush.msra.mxu0 %v434
        %783 = vmatpush.msra.mxu0 %v433
        %784 = vmatpush.msra.mxu0 %v432
        %785 = vmatpush.msra.mxu0 %v431
        %786 = vmatpush.msra.mxu0 %v430
        %787 = vmatpush.msra.mxu0 %v429
        %788 = vmatpush.msra.mxu0 %v428
        %789 = vmatpush.msra.mxu0 %v427
        %790 = vmatpush.msra.mxu0 %v426
        %791 = vmatpush.msra.mxu0 %v425
        %792 = vmatpush.msra.mxu0 %v424
        %793 = vmatmul.f32.gmra.mxu0 %v715
        %v794 = vpop.f32.mrf.mxu0
        %v795 = vadd.f32 %v775, %v794
        %796 = vdwg.mxu0
        %v797 = vxor.u32 %v795, 2147483648
        %v798 = vmul.f32 %v797, 1.442695
        %v799 = vpow.pop %v798
        %v800 = vadd.f32 %v799, 1.0
        %v801 = vrcp.pop %v800
        %v802 = vmul.f32 %v800, %v801
        %v803 = vsub.f32 1.0, %v802
        %v804 = vmul.f32 %v801, %v803
        %v805 = vadd.f32 %v801, %v804
        %vm806 = vweird.f32 %v800
        %vm807 = vweird.f32 %v801
        %vm808 = vmor %vm806, %vm807
        %v809 = vsel %vm808, %v801, %v805
        %v810 = vand.u32 2147483647, %v800
        %vm811 = vcmp.eq.f32.partialorder %v810, 8.507059e+37
        %v812 = vand.u32 %v800, 2147483648
        %v813 = vor.u32 1.1754944e-38, %v812
        %v814 = vsel %vm811, %v813, %v809
        %v815 = vmul.f32 1.0, %v814
        %v816 = vmul.f32 %v756, %v815
        %v817 = vmul.f32 %v816, %v557
        %818 = vadd.xlane.f32.xlu0 %v817
        %v819 = vpop.xlane.xlu0 %818
        %v820 = vadd.f32 %v819, %v563
        %v821 = vld [vmem:[%s366 + $0x1] sm:$0x1]
        %v822 = vperm.slane %v821, 0
        %vm823 = vcmp.lt.s32.totalorder %v567, %v822
        %v824 = vld [vmem:[#allocation2 + $0x1] sm:$0x1]
        %v825 = vsel %vm823, %v820, -1e+30
        %v826 = vsel %vm573, %v825, -inf
        %827 = vmax.xlane.f32.xlu0 %v826
        %v828 = vpop.xlane.xlu0 %827
        %v829 = vrot.slane %v828, 4
        %v830 = vmax.f32 %v828, %v829
        %v831 = vrot.slane %v830, 2
        %v832 = vmax.f32 %v830, %v831
        %v833 = vrot.slane %v832, 1
        %v834 = vmax.f32 %v832, %v833
        %s835 = vtos %v834
        %v836 = vstv %s835
        %v837 = vmax.f32 %v824, %v836
        %v838 = vsub.f32 %v824, %v837
        %v839 = vmul.f32 %v838, 1.442695
        %v840 = vpow.pop %v839
        %v841 = vperm.slane %v837, 0
        %v842 = vsub.f32 %v820, %v841
        %v843 = vmul.f32 %v842, 1.442695
        %v844 = vpow.pop %v843
        %v845 = vsel %vm823, %v844, 0.0
        %v846 = vld [vmem:[#allocation3 + $0x1] sm:$0x1]
        %v847 = vmul.f32 %v840, %v846
        %v848 = vsel %vm573, %v845, 0.0
        %849 = vadd.xlane.f32.xlu0 %v848
        %v850 = vpop.xlane.xlu0 %849
        %v851 = vrot.slane %v850, 4
        %v852 = vadd.f32 %v850, %v851
        %v853 = vrot.slane %v852, 2
        %v854 = vadd.f32 %v852, %v853
        %v855 = vrot.slane %v854, 1
        %v856 = vadd.f32 %v854, %v855
        %s857 = vtos %v856
        %v858 = vstv %s857
        %v859 = vadd.f32 %v847, %v858
        %860 = vst.msk [vmem:[#allocation3 + $0x1] sm:$0x1] %vm608, %v859
        %861 = vxpose.xlu0.b32.start [1/16] %v845, 128
        %862 = vxpose.xlu0.b32.cont [2/16] 0.0, 128
        %863 = vxpose.xlu0.b32.cont [3/16] 0.0, 128
        %864 = vxpose.xlu0.b32.cont [4/16] 0.0, 128
        %865 = vxpose.xlu0.b32.cont [5/16] 0.0, 128
        %866 = vxpose.xlu0.b32.cont [6/16] 0.0, 128
        %867 = vxpose.xlu0.b32.cont [7/16] 0.0, 128
        %868 = vxpose.xlu0.b32.cont [8/16] 0.0, 128
        %869 = vxpose.xlu0.b32.cont [9/16] 0.0, 128
        %870 = vxpose.xlu0.b32.cont [10/16] 0.0, 128
        %871 = vxpose.xlu0.b32.cont [11/16] 0.0, 128
        %872 = vxpose.xlu0.b32.cont [12/16] 0.0, 128
        %873 = vxpose.xlu0.b32.cont [13/16] 0.0, 128
        %874 = vxpose.xlu0.b32.cont [14/16] 0.0, 128
        %875 = vxpose.xlu0.b32.cont [15/16] 0.0, 128
        %876 = vxpose.xlu0.b32.end [16/16] 0.0, 128
        %v877 = vpop.trf.xlu0
        %v878 = vpop.trf.xlu0
        %v879 = vpop.trf.xlu0
        %v880 = vpop.trf.xlu0
        %v881 = vpop.trf.xlu0
        %v882 = vpop.trf.xlu0
        %v883 = vpop.trf.xlu0
        %v884 = vpop.trf.xlu0
        %v885 = vpop.trf.xlu0
        %v886 = vpop.trf.xlu0
        %v887 = vpop.trf.xlu0
        %v888 = vpop.trf.xlu0
        %v889 = vpop.trf.xlu0
        %v890 = vpop.trf.xlu0
        %v891 = vpop.trf.xlu0
        %v892 = vpop.trf.xlu0
        %v894 = vsel %vm642, %v877, 0
        %896 = vmatpush.msra.mxu0 0.0
        %897 = vmatpush.msra.mxu0 0.0
        %898 = vmatpush.msra.mxu0 0.0
        %899 = vmatpush.msra.mxu0 0.0
        %900 = vmatpush.msra.mxu0 0.0
        %901 = vmatpush.msra.mxu0 0.0
        %902 = vmatpush.msra.mxu0 0.0
        %903 = vmatpush.msra.mxu0 0.0
        %904 = vmatpush.msra.mxu0 0.0
        %905 = vmatpush.msra.mxu0 0.0
        %906 = vmatpush.msra.mxu0 0.0
        %907 = vmatpush.msra.mxu0 0.0
        %908 = vmatpush.msra.mxu0 0.0
        %909 = vmatpush.msra.mxu0 0.0
        %910 = vmatpush.msra.mxu0 0.0
        %911 = vmatpush.msra.mxu0 %v714
        %912 = vmatmul.f32.gmra.mxu0 %v894
        %v913 = vpop.f32.mrf.mxu0
        %v914 = vadd.f32 0.0, %v913
        %915 = vdwg.mxu0
        %916 = vmatpush.msra.mxu0 0.0
        %917 = vmatpush.msra.mxu0 0.0
        %918 = vmatpush.msra.mxu0 0.0
        %919 = vmatpush.msra.mxu0 0.0
        %920 = vmatpush.msra.mxu0 0.0
        %921 = vmatpush.msra.mxu0 0.0
        %922 = vmatpush.msra.mxu0 0.0
        %923 = vmatpush.msra.mxu0 0.0
        %924 = vmatpush.msra.mxu0 0.0
        %925 = vmatpush.msra.mxu0 0.0
        %926 = vmatpush.msra.mxu0 0.0
        %927 = vmatpush.msra.mxu0 0.0
        %928 = vmatpush.msra.mxu0 0.0
        %929 = vmatpush.msra.mxu0 0.0
        %930 = vmatpush.msra.mxu0 0.0
        %931 = vmatpush.msra.mxu0 %v715
        %932 = vmatmul.f32.gmra.mxu0 %v894
        %v933 = vpop.f32.mrf.mxu0
        %v934 = vadd.f32 0.0, %v933
        %935 = vdwg.mxu0
        %s936 = scalar_lea.vmem [#allocation4], 1
        %v937 = vld [vmem:[%s936] ss:$4 sm:$0x3]
        %939 = vset.pattern.permute.xlu0 0
        %940 = vperm.xlu0 %939, %v840
        %v941 = vpop.permute.xlu0 %940
        %v944 = vperm.slane %v937, 0
        %v945 = vperm.slane %v937, 1
        %v948 = vmul.f32 %v941, %v944
        %v949 = vmul.f32 %v941, %v945
        %v950 = vadd.f32 %v948, %v914
        %v951 = vadd.f32 %v949, %v934
        %v954 = vrot.slane %v951, 7
        %v955 = vsel %vm704, %v950, %v954
        %957 = vst.msk [vmem:[%s936] ss:$4 sm:$0x3] %vm710, %v955
        %958 = vst.msk [vmem:[#allocation2 + $0x1] sm:$0x1] %vm608, %v837
        %s959 = scalar_lea.vmem %s333, 32 [#allocation6]
        %v960 = vld [vmem:[%s959] sm:$0xff]
        %v961 = vld [vmem:[%s959 + $0x8] sm:$0xff]
        %962 = vmatpush.msra.mxu0 %v391
        %963 = vmatpush.msra.mxu0 %v390
        %964 = vmatpush.msra.mxu0 %v389
        %965 = vmatpush.msra.mxu0 %v388
        %966 = vmatpush.msra.mxu0 %v387
        %967 = vmatpush.msra.mxu0 %v386
        %968 = vmatpush.msra.mxu0 %v385
        %969 = vmatpush.msra.mxu0 %v384
        %970 = vmatpush.msra.mxu0 %v383
        %971 = vmatpush.msra.mxu0 %v382
        %972 = vmatpush.msra.mxu0 %v381
        %973 = vmatpush.msra.mxu0 %v380
        %974 = vmatpush.msra.mxu0 %v379
        %975 = vmatpush.msra.mxu0 %v378
        %976 = vmatpush.msra.mxu0 %v377
        %977 = vmatpush.msra.mxu0 %v376
        %978 = vmatmul.f32.gmra.mxu0 %v960
        %v979 = vpop.f32.mrf.mxu0
        %v980 = vadd.f32 %v450, %v979
        %981 = vdwg.mxu0
        %982 = vmatpush.msra.mxu0 %v407
        %983 = vmatpush.msra.mxu0 %v406
        %984 = vmatpush.msra.mxu0 %v405
        %985 = vmatpush.msra.mxu0 %v404
        %986 = vmatpush.msra.mxu0 %v403
        %987 = vmatpush.msra.mxu0 %v402
        %988 = vmatpush.msra.mxu0 %v401
        %989 = vmatpush.msra.mxu0 %v400
        %990 = vmatpush.msra.mxu0 %v399
        %991 = vmatpush.msra.mxu0 %v398
        %992 = vmatpush.msra.mxu0 %v397
        %993 = vmatpush.msra.mxu0 %v396
        %994 = vmatpush.msra.mxu0 %v395
        %995 = vmatpush.msra.mxu0 %v394
        %996 = vmatpush.msra.mxu0 %v393
        %997 = vmatpush.msra.mxu0 %v392
        %998 = vmatmul.f32.gmra.mxu0 %v961
        %v999 = vpop.f32.mrf.mxu0
        %v1000 = vadd.f32 %v980, %v999
        %1001 = vdwg.mxu0
        %v1002 = vtanh.pop %v1000
        %1003 = vmatpush.msra.mxu0 %v423
        %1004 = vmatpush.msra.mxu0 %v422
        %1005 = vmatpush.msra.mxu0 %v421
        %1006 = vmatpush.msra.mxu0 %v420
        %1007 = vmatpush.msra.mxu0 %v419
        %1008 = vmatpush.msra.mxu0 %v418
        %1009 = vmatpush.msra.mxu0 %v417
        %1010 = vmatpush.msra.mxu0 %v416
        %1011 = vmatpush.msra.mxu0 %v415
        %1012 = vmatpush.msra.mxu0 %v414
        %1013 = vmatpush.msra.mxu0 %v413
        %1014 = vmatpush.msra.mxu0 %v412
        %1015 = vmatpush.msra.mxu0 %v411
        %1016 = vmatpush.msra.mxu0 %v410
        %1017 = vmatpush.msra.mxu0 %v409
        %1018 = vmatpush.msra.mxu0 %v408
        %1019 = vmatmul.f32.gmra.mxu0 %v960
        %v1020 = vpop.f32.mrf.mxu0
        %v1021 = vadd.f32 %v494, %v1020
        %1022 = vdwg.mxu0
        %1023 = vmatpush.msra.mxu0 %v439
        %1024 = vmatpush.msra.mxu0 %v438
        %1025 = vmatpush.msra.mxu0 %v437
        %1026 = vmatpush.msra.mxu0 %v436
        %1027 = vmatpush.msra.mxu0 %v435
        %1028 = vmatpush.msra.mxu0 %v434
        %1029 = vmatpush.msra.mxu0 %v433
        %1030 = vmatpush.msra.mxu0 %v432
        %1031 = vmatpush.msra.mxu0 %v431
        %1032 = vmatpush.msra.mxu0 %v430
        %1033 = vmatpush.msra.mxu0 %v429
        %1034 = vmatpush.msra.mxu0 %v428
        %1035 = vmatpush.msra.mxu0 %v427
        %1036 = vmatpush.msra.mxu0 %v426
        %1037 = vmatpush.msra.mxu0 %v425
        %1038 = vmatpush.msra.mxu0 %v424
        %1039 = vmatmul.f32.gmra.mxu0 %v961
        %v1040 = vpop.f32.mrf.mxu0
        %v1041 = vadd.f32 %v1021, %v1040
        %1042 = vdwg.mxu0
        %v1043 = vxor.u32 %v1041, 2147483648
        %v1044 = vmul.f32 %v1043, 1.442695
        %v1045 = vpow.pop %v1044
        %v1046 = vadd.f32 %v1045, 1.0
        %v1047 = vrcp.pop %v1046
        %v1048 = vmul.f32 %v1046, %v1047
        %v1049 = vsub.f32 1.0, %v1048
        %v1050 = vmul.f32 %v1047, %v1049
        %v1051 = vadd.f32 %v1047, %v1050
        %vm1052 = vweird.f32 %v1046
        %vm1053 = vweird.f32 %v1047
        %vm1054 = vmor %vm1052, %vm1053
        %v1055 = vsel %vm1054, %v1047, %v1051
        %v1056 = vand.u32 2147483647, %v1046
        %vm1057 = vcmp.eq.f32.partialorder %v1056, 8.507059e+37
        %v1058 = vand.u32 %v1046, 2147483648
        %v1059 = vor.u32 1.1754944e-38, %v1058
        %v1060 = vsel %vm1057, %v1059, %v1055
        %v1061 = vmul.f32 1.0, %v1060
        %v1062 = vmul.f32 %v1002, %v1061
        %v1063 = vmul.f32 %v1062, %v557
        %1064 = vadd.xlane.f32.xlu0 %v1063
        %v1065 = vpop.xlane.xlu0 %1064
        %v1066 = vadd.f32 %v1065, %v563
        %v1067 = vld [vmem:[%s366 + $0x2] sm:$0x1]
        %v1068 = vperm.slane %v1067, 0
        %vm1069 = vcmp.lt.s32.totalorder %v567, %v1068
        %v1070 = vld [vmem:[#allocation2 + $0x2] sm:$0x1]
        %v1071 = vsel %vm1069, %v1066, -1e+30
        %v1072 = vsel %vm573, %v1071, -inf
        %1073 = vmax.xlane.f32.xlu0 %v1072
        %v1074 = vpop.xlane.xlu0 %1073
        %v1075 = vrot.slane %v1074, 4
        %v1076 = vmax.f32 %v1074, %v1075
        %v1077 = vrot.slane %v1076, 2
        %v1078 = vmax.f32 %v1076, %v1077
        %v1079 = vrot.slane %v1078, 1
        %v1080 = vmax.f32 %v1078, %v1079
        %s1081 = vtos %v1080
        %v1082 = vstv %s1081
        %v1083 = vmax.f32 %v1070, %v1082
        %v1084 = vsub.f32 %v1070, %v1083
        %v1085 = vmul.f32 %v1084, 1.442695
        %v1086 = vpow.pop %v1085
        %v1087 = vperm.slane %v1083, 0
        %v1088 = vsub.f32 %v1066, %v1087
        %v1089 = vmul.f32 %v1088, 1.442695
        %v1090 = vpow.pop %v1089
        %v1091 = vsel %vm1069, %v1090, 0.0
        %v1092 = vld [vmem:[#allocation3 + $0x2] sm:$0x1]
        %v1093 = vmul.f32 %v1086, %v1092
        %v1094 = vsel %vm573, %v1091, 0.0
        %1095 = vadd.xlane.f32.xlu0 %v1094
        %v1096 = vpop.xlane.xlu0 %1095
        %v1097 = vrot.slane %v1096, 4
        %v1098 = vadd.f32 %v1096, %v1097
        %v1099 = vrot.slane %v1098, 2
        %v1100 = vadd.f32 %v1098, %v1099
        %v1101 = vrot.slane %v1100, 1
        %v1102 = vadd.f32 %v1100, %v1101
        %s1103 = vtos %v1102
        %v1104 = vstv %s1103
        %v1105 = vadd.f32 %v1093, %v1104
        %1106 = vst.msk [vmem:[#allocation3 + $0x2] sm:$0x1] %vm608, %v1105
        %1107 = vxpose.xlu0.b32.start [1/16] %v1091, 128
        %1108 = vxpose.xlu0.b32.cont [2/16] 0.0, 128
        %1109 = vxpose.xlu0.b32.cont [3/16] 0.0, 128
        %1110 = vxpose.xlu0.b32.cont [4/16] 0.0, 128
        %1111 = vxpose.xlu0.b32.cont [5/16] 0.0, 128
        %1112 = vxpose.xlu0.b32.cont [6/16] 0.0, 128
        %1113 = vxpose.xlu0.b32.cont [7/16] 0.0, 128
        %1114 = vxpose.xlu0.b32.cont [8/16] 0.0, 128
        %1115 = vxpose.xlu0.b32.cont [9/16] 0.0, 128
        %1116 = vxpose.xlu0.b32.cont [10/16] 0.0, 128
        %1117 = vxpose.xlu0.b32.cont [11/16] 0.0, 128
        %1118 = vxpose.xlu0.b32.cont [12/16] 0.0, 128
        %1119 = vxpose.xlu0.b32.cont [13/16] 0.0, 128
        %1120 = vxpose.xlu0.b32.cont [14/16] 0.0, 128
        %1121 = vxpose.xlu0.b32.cont [15/16] 0.0, 128
        %1122 = vxpose.xlu0.b32.end [16/16] 0.0, 128
        %v1123 = vpop.trf.xlu0
        %v1124 = vpop.trf.xlu0
        %v1125 = vpop.trf.xlu0
        %v1126 = vpop.trf.xlu0
        %v1127 = vpop.trf.xlu0
        %v1128 = vpop.trf.xlu0
        %v1129 = vpop.trf.xlu0
        %v1130 = vpop.trf.xlu0
        %v1131 = vpop.trf.xlu0
        %v1132 = vpop.trf.xlu0
        %v1133 = vpop.trf.xlu0
        %v1134 = vpop.trf.xlu0
        %v1135 = vpop.trf.xlu0
        %v1136 = vpop.trf.xlu0
        %v1137 = vpop.trf.xlu0
        %v1138 = vpop.trf.xlu0
        %v1140 = vsel %vm642, %v1123, 0
        %1142 = vmatpush.msra.mxu0 0.0
        %1143 = vmatpush.msra.mxu0 0.0
        %1144 = vmatpush.msra.mxu0 0.0
        %1145 = vmatpush.msra.mxu0 0.0
        %1146 = vmatpush.msra.mxu0 0.0
        %1147 = vmatpush.msra.mxu0 0.0
        %1148 = vmatpush.msra.mxu0 0.0
        %1149 = vmatpush.msra.mxu0 0.0
        %1150 = vmatpush.msra.mxu0 0.0
        %1151 = vmatpush.msra.mxu0 0.0
        %1152 = vmatpush.msra.mxu0 0.0
        %1153 = vmatpush.msra.mxu0 0.0
        %1154 = vmatpush.msra.mxu0 0.0
        %1155 = vmatpush.msra.mxu0 0.0
        %1156 = vmatpush.msra.mxu0 0.0
        %1157 = vmatpush.msra.mxu0 %v960
        %1158 = vmatmul.f32.gmra.mxu0 %v1140
        %v1159 = vpop.f32.mrf.mxu0
        %v1160 = vadd.f32 0.0, %v1159
        %1161 = vdwg.mxu0
        %1162 = vmatpush.msra.mxu0 0.0
        %1163 = vmatpush.msra.mxu0 0.0
        %1164 = vmatpush.msra.mxu0 0.0
        %1165 = vmatpush.msra.mxu0 0.0
        %1166 = vmatpush.msra.mxu0 0.0
        %1167 = vmatpush.msra.mxu0 0.0
        %1168 = vmatpush.msra.mxu0 0.0
        %1169 = vmatpush.msra.mxu0 0.0
        %1170 = vmatpush.msra.mxu0 0.0
        %1171 = vmatpush.msra.mxu0 0.0
        %1172 = vmatpush.msra.mxu0 0.0
        %1173 = vmatpush.msra.mxu0 0.0
        %1174 = vmatpush.msra.mxu0 0.0
        %1175 = vmatpush.msra.mxu0 0.0
        %1176 = vmatpush.msra.mxu0 0.0
        %1177 = vmatpush.msra.mxu0 %v961
        %1178 = vmatmul.f32.gmra.mxu0 %v1140
        %v1179 = vpop.f32.mrf.mxu0
        %v1180 = vadd.f32 0.0, %v1179
        %1181 = vdwg.mxu0
        %s1182 = scalar_lea.vmem [#allocation4], 2
        %v1183 = vld [vmem:[%s1182] ss:$4 sm:$0x3]
        %1185 = vset.pattern.permute.xlu0 0
        %1186 = vperm.xlu0 %1185, %v1086
        %v1187 = vpop.permute.xlu0 %1186
        %v1190 = vperm.slane %v1183, 0
        %v1191 = vperm.slane %v1183, 1
        %v1194 = vmul.f32 %v1187, %v1190
        %v1195 = vmul.f32 %v1187, %v1191
        %v1196 = vadd.f32 %v1194, %v1160
        %v1197 = vadd.f32 %v1195, %v1180
        %v1200 = vrot.slane %v1197, 7
        %v1201 = vsel %vm704, %v1196, %v1200
        %1203 = vst.msk [vmem:[%s1182] ss:$4 sm:$0x3] %vm710, %v1201
        %1204 = vst.msk [vmem:[#allocation2 + $0x2] sm:$0x1] %vm608, %v1083
        %s1205 = scalar_lea.vmem %s333, 48 [#allocation6]
        %v1206 = vld [vmem:[%s1205] sm:$0xff]
        %v1207 = vld [vmem:[%s1205 + $0x8] sm:$0xff]
        %1208 = vmatpush.msra.mxu0 %v391
        %1209 = vmatpush.msra.mxu0 %v390
        %1210 = vmatpush.msra.mxu0 %v389
        %1211 = vmatpush.msra.mxu0 %v388
        %1212 = vmatpush.msra.mxu0 %v387
        %1213 = vmatpush.msra.mxu0 %v386
        %1214 = vmatpush.msra.mxu0 %v385
        %1215 = vmatpush.msra.mxu0 %v384
        %1216 = vmatpush.msra.mxu0 %v383
        %1217 = vmatpush.msra.mxu0 %v382
        %1218 = vmatpush.msra.mxu0 %v381
        %1219 = vmatpush.msra.mxu0 %v380
        %1220 = vmatpush.msra.mxu0 %v379
        %1221 = vmatpush.msra.mxu0 %v378
        %1222 = vmatpush.msra.mxu0 %v377
        %1223 = vmatpush.msra.mxu0 %v376
        %1224 = vmatmul.f32.gmra.mxu0 %v1206
        %v1225 = vpop.f32.mrf.mxu0
        %v1226 = vadd.f32 %v450, %v1225
        %1227 = vdwg.mxu0
        %1228 = vmatpush.msra.mxu0 %v407
        %1229 = vmatpush.msra.mxu0 %v406
        %1230 = vmatpush.msra.mxu0 %v405
        %1231 = vmatpush.msra.mxu0 %v404
        %1232 = vmatpush.msra.mxu0 %v403
        %1233 = vmatpush.msra.mxu0 %v402
        %1234 = vmatpush.msra.mxu0 %v401
        %1235 = vmatpush.msra.mxu0 %v400
        %1236 = vmatpush.msra.mxu0 %v399
        %1237 = vmatpush.msra.mxu0 %v398
        %1238 = vmatpush.msra.mxu0 %v397
        %1239 = vmatpush.msra.mxu0 %v396
        %1240 = vmatpush.msra.mxu0 %v395
        %1241 = vmatpush.msra.mxu0 %v394
        %1242 = vmatpush.msra.mxu0 %v393
        %1243 = vmatpush.msra.mxu0 %v392
        %1244 = vmatmul.f32.gmra.mxu0 %v1207
        %v1245 = vpop.f32.mrf.mxu0
        %v1246 = vadd.f32 %v1226, %v1245
        %1247 = vdwg.mxu0
        %v1248 = vtanh.pop %v1246
        %1249 = vmatpush.msra.mxu0 %v423
        %1250 = vmatpush.msra.mxu0 %v422
        %1251 = vmatpush.msra.mxu0 %v421
        %1252 = vmatpush.msra.mxu0 %v420
        %1253 = vmatpush.msra.mxu0 %v419
        %1254 = vmatpush.msra.mxu0 %v418
        %1255 = vmatpush.msra.mxu0 %v417
        %1256 = vmatpush.msra.mxu0 %v416
        %1257 = vmatpush.msra.mxu0 %v415
        %1258 = vmatpush.msra.mxu0 %v414
        %1259 = vmatpush.msra.mxu0 %v413
        %1260 = vmatpush.msra.mxu0 %v412
        %1261 = vmatpush.msra.mxu0 %v411
        %1262 = vmatpush.msra.mxu0 %v410
        %1263 = vmatpush.msra.mxu0 %v409
        %1264 = vmatpush.msra.mxu0 %v408
        %1265 = vmatmul.f32.gmra.mxu0 %v1206
        %v1266 = vpop.f32.mrf.mxu0
        %v1267 = vadd.f32 %v494, %v1266
        %1268 = vdwg.mxu0
        %1269 = vmatpush.msra.mxu0 %v439
        %1270 = vmatpush.msra.mxu0 %v438
        %1271 = vmatpush.msra.mxu0 %v437
        %1272 = vmatpush.msra.mxu0 %v436
        %1273 = vmatpush.msra.mxu0 %v435
        %1274 = vmatpush.msra.mxu0 %v434
        %1275 = vmatpush.msra.mxu0 %v433
        %1276 = vmatpush.msra.mxu0 %v432
        %1277 = vmatpush.msra.mxu0 %v431
        %1278 = vmatpush.msra.mxu0 %v430
        %1279 = vmatpush.msra.mxu0 %v429
        %1280 = vmatpush.msra.mxu0 %v428
        %1281 = vmatpush.msra.mxu0 %v427
        %1282 = vmatpush.msra.mxu0 %v426
        %1283 = vmatpush.msra.mxu0 %v425
        %1284 = vmatpush.msra.mxu0 %v424
        %1285 = vmatmul.f32.gmra.mxu0 %v1207
        %v1286 = vpop.f32.mrf.mxu0
        %v1287 = vadd.f32 %v1267, %v1286
        %1288 = vdwg.mxu0
        %v1289 = vxor.u32 %v1287, 2147483648
        %v1290 = vmul.f32 %v1289, 1.442695
        %v1291 = vpow.pop %v1290
        %v1292 = vadd.f32 %v1291, 1.0
        %v1293 = vrcp.pop %v1292
        %v1294 = vmul.f32 %v1292, %v1293
        %v1295 = vsub.f32 1.0, %v1294
        %v1296 = vmul.f32 %v1293, %v1295
        %v1297 = vadd.f32 %v1293, %v1296
        %vm1298 = vweird.f32 %v1292
        %vm1299 = vweird.f32 %v1293
        %vm1300 = vmor %vm1298, %vm1299
        %v1301 = vsel %vm1300, %v1293, %v1297
        %v1302 = vand.u32 2147483647, %v1292
        %vm1303 = vcmp.eq.f32.partialorder %v1302, 8.507059e+37
        %v1304 = vand.u32 %v1292, 2147483648
        %v1305 = vor.u32 1.1754944e-38, %v1304
        %v1306 = vsel %vm1303, %v1305, %v1301
        %v1307 = vmul.f32 1.0, %v1306
        %v1308 = vmul.f32 %v1248, %v1307
        %v1309 = vmul.f32 %v1308, %v557
        %1310 = vadd.xlane.f32.xlu0 %v1309
        %v1311 = vpop.xlane.xlu0 %1310
        %v1312 = vadd.f32 %v1311, %v563
        %v1313 = vld [vmem:[%s366 + $0x3] sm:$0x1]
        %v1314 = vperm.slane %v1313, 0
        %vm1315 = vcmp.lt.s32.totalorder %v567, %v1314
        %v1316 = vld [vmem:[#allocation2 + $0x3] sm:$0x1]
        %v1317 = vsel %vm1315, %v1312, -1e+30
        %v1318 = vsel %vm573, %v1317, -inf
        %1319 = vmax.xlane.f32.xlu0 %v1318
        %v1320 = vpop.xlane.xlu0 %1319
        %v1321 = vrot.slane %v1320, 4
        %v1322 = vmax.f32 %v1320, %v1321
        %v1323 = vrot.slane %v1322, 2
        %v1324 = vmax.f32 %v1322, %v1323
        %v1325 = vrot.slane %v1324, 1
        %v1326 = vmax.f32 %v1324, %v1325
        %s1327 = vtos %v1326
        %v1328 = vstv %s1327
        %v1329 = vmax.f32 %v1316, %v1328
        %v1330 = vsub.f32 %v1316, %v1329
        %v1331 = vmul.f32 %v1330, 1.442695
        %v1332 = vpow.pop %v1331
        %v1333 = vperm.slane %v1329, 0
        %v1334 = vsub.f32 %v1312, %v1333
        %v1335 = vmul.f32 %v1334, 1.442695
        %v1336 = vpow.pop %v1335
        %v1337 = vsel %vm1315, %v1336, 0.0
        %v1338 = vld [vmem:[#allocation3 + $0x3] sm:$0x1]
        %v1339 = vmul.f32 %v1332, %v1338
        %v1340 = vsel %vm573, %v1337, 0.0
        %1341 = vadd.xlane.f32.xlu0 %v1340
        %v1342 = vpop.xlane.xlu0 %1341
        %v1343 = vrot.slane %v1342, 4
        %v1344 = vadd.f32 %v1342, %v1343
        %v1345 = vrot.slane %v1344, 2
        %v1346 = vadd.f32 %v1344, %v1345
        %v1347 = vrot.slane %v1346, 1
        %v1348 = vadd.f32 %v1346, %v1347
        %s1349 = vtos %v1348
        %v1350 = vstv %s1349
        %v1351 = vadd.f32 %v1339, %v1350
        %1352 = vst.msk [vmem:[#allocation3 + $0x3] sm:$0x1] %vm608, %v1351
        %1353 = vxpose.xlu0.b32.start [1/16] %v1337, 128
        %1354 = vxpose.xlu0.b32.cont [2/16] 0.0, 128
        %1355 = vxpose.xlu0.b32.cont [3/16] 0.0, 128
        %1356 = vxpose.xlu0.b32.cont [4/16] 0.0, 128
        %1357 = vxpose.xlu0.b32.cont [5/16] 0.0, 128
        %1358 = vxpose.xlu0.b32.cont [6/16] 0.0, 128
        %1359 = vxpose.xlu0.b32.cont [7/16] 0.0, 128
        %1360 = vxpose.xlu0.b32.cont [8/16] 0.0, 128
        %1361 = vxpose.xlu0.b32.cont [9/16] 0.0, 128
        %1362 = vxpose.xlu0.b32.cont [10/16] 0.0, 128
        %1363 = vxpose.xlu0.b32.cont [11/16] 0.0, 128
        %1364 = vxpose.xlu0.b32.cont [12/16] 0.0, 128
        %1365 = vxpose.xlu0.b32.cont [13/16] 0.0, 128
        %1366 = vxpose.xlu0.b32.cont [14/16] 0.0, 128
        %1367 = vxpose.xlu0.b32.cont [15/16] 0.0, 128
        %1368 = vxpose.xlu0.b32.end [16/16] 0.0, 128
        %v1369 = vpop.trf.xlu0
        %v1370 = vpop.trf.xlu0
        %v1371 = vpop.trf.xlu0
        %v1372 = vpop.trf.xlu0
        %v1373 = vpop.trf.xlu0
        %v1374 = vpop.trf.xlu0
        %v1375 = vpop.trf.xlu0
        %v1376 = vpop.trf.xlu0
        %v1377 = vpop.trf.xlu0
        %v1378 = vpop.trf.xlu0
        %v1379 = vpop.trf.xlu0
        %v1380 = vpop.trf.xlu0
        %v1381 = vpop.trf.xlu0
        %v1382 = vpop.trf.xlu0
        %v1383 = vpop.trf.xlu0
        %v1384 = vpop.trf.xlu0
        %v1386 = vsel %vm642, %v1369, 0
        %1388 = vmatpush.msra.mxu0 0.0
        %1389 = vmatpush.msra.mxu0 0.0
        %1390 = vmatpush.msra.mxu0 0.0
        %1391 = vmatpush.msra.mxu0 0.0
        %1392 = vmatpush.msra.mxu0 0.0
        %1393 = vmatpush.msra.mxu0 0.0
        %1394 = vmatpush.msra.mxu0 0.0
        %1395 = vmatpush.msra.mxu0 0.0
        %1396 = vmatpush.msra.mxu0 0.0
        %1397 = vmatpush.msra.mxu0 0.0
        %1398 = vmatpush.msra.mxu0 0.0
        %1399 = vmatpush.msra.mxu0 0.0
        %1400 = vmatpush.msra.mxu0 0.0
        %1401 = vmatpush.msra.mxu0 0.0
        %1402 = vmatpush.msra.mxu0 0.0
        %1403 = vmatpush.msra.mxu0 %v1206
        %1404 = vmatmul.f32.gmra.mxu0 %v1386
        %v1405 = vpop.f32.mrf.mxu0
        %v1406 = vadd.f32 0.0, %v1405
        %1407 = vdwg.mxu0
        %1408 = vmatpush.msra.mxu0 0.0
        %1409 = vmatpush.msra.mxu0 0.0
        %1410 = vmatpush.msra.mxu0 0.0
        %1411 = vmatpush.msra.mxu0 0.0
        %1412 = vmatpush.msra.mxu0 0.0
        %1413 = vmatpush.msra.mxu0 0.0
        %1414 = vmatpush.msra.mxu0 0.0
        %1415 = vmatpush.msra.mxu0 0.0
        %1416 = vmatpush.msra.mxu0 0.0
        %1417 = vmatpush.msra.mxu0 0.0
        %1418 = vmatpush.msra.mxu0 0.0
        %1419 = vmatpush.msra.mxu0 0.0
        %1420 = vmatpush.msra.mxu0 0.0
        %1421 = vmatpush.msra.mxu0 0.0
        %1422 = vmatpush.msra.mxu0 0.0
        %1423 = vmatpush.msra.mxu0 %v1207
        %1424 = vmatmul.f32.gmra.mxu0 %v1386
        %v1425 = vpop.f32.mrf.mxu0
        %v1426 = vadd.f32 0.0, %v1425
        %1427 = vdwg.mxu0
        %s1428 = scalar_lea.vmem [#allocation4], 3
        %v1429 = vld [vmem:[%s1428] ss:$4 sm:$0x3]
        %1431 = vset.pattern.permute.xlu0 0
        %1432 = vperm.xlu0 %1431, %v1332
        %v1433 = vpop.permute.xlu0 %1432
        %v1436 = vperm.slane %v1429, 0
        %v1437 = vperm.slane %v1429, 1
        %v1440 = vmul.f32 %v1433, %v1436
        %v1441 = vmul.f32 %v1433, %v1437
        %v1442 = vadd.f32 %v1440, %v1406
        %v1443 = vadd.f32 %v1441, %v1426
        %v1446 = vrot.slane %v1443, 7
        %v1447 = vsel %vm704, %v1442, %v1446
        %1449 = vst.msk [vmem:[%s1428] ss:$4 sm:$0x3] %vm710, %v1447
        %1450 = vst.msk [vmem:[#allocation2 + $0x3] sm:$0x1] %vm608, %v1329
        %p1451 = scmp.eq.s32.totalorder %s27, 3
        // Predicated region
        $region80: #{_milnet_call.1} parent=70 // pred_check
          %p1452 = pneg %p1451
        $region81: #{_milnet_call.1} parent=70 // pred_check_branch
          %1454 = sbr.rel (%p1452) target = $region83
        $region82: #{_milnet_call.1} parent=70 // pred_region
          %v1455 = vld [vmem:[#allocation3] sm:$0xf]
          %vm1456 = vcmp.gt.f32.partialorder %v1455, 0.0
          %v1457 = vsel %vm1456, %v1455, 1.0
          %v1458 = vrcp.pop %v1457
          %v1459 = vmul.f32 %v1457, %v1458
          %v1460 = vsub.f32 1.0, %v1459
          %v1461 = vmul.f32 %v1458, %v1460
          %v1462 = vadd.f32 %v1458, %v1461
          %vm1463 = vweird.f32 %v1457
          %vm1464 = vweird.f32 %v1458
          %vm1465 = vmor %vm1463, %vm1464
          %v1466 = vsel %vm1465, %v1458, %v1462
          %v1467 = vand.u32 2147483647, %v1457
          %vm1468 = vcmp.eq.f32.partialorder %v1467, 8.507059e+37
          %v1469 = vand.u32 %v1457, 2147483648
          %v1470 = vor.u32 1.1754944e-38, %v1469
          %v1471 = vsel %vm1468, %v1470, %v1466
          %v1472 = vld [vmem:[#allocation4] sm:$0xff]
          %1474 = vset.pattern.permute.xlu0 0
          %1475 = vperm.xlu0 %1474, %v1471
          %v1476 = vpop.permute.xlu0 %1475
          %v1478 = vunpack.c.l.s4 839922192
          %v1479 = vunpack.c.0.s8 %v1478
          %v1480 = vperm.slane %v1476, %v1479
          %v1482 = vmul.f32 %v1472, %v1480
          %v1483 = vsel %vm1456, 1, 0
          %1484 = vset.pattern.permute.xlu0 0
          %1485 = vperm.xlu0 %1484, %v1483
          %v1486 = vpop.permute.xlu0 %1485
          %vm1487 = vcmp.eq.s32.totalorder %v1486, 1
          %1489 = vst [vmem:[#allocation1] ss:$2 sm:$0xff] %v1482
          %v1490 = vld.sshfl [vmem:[#allocation1] sm:$0xff pattern:$0x75316420]
          %v1491 = vld.sshfl [vmem:[#allocation1 + $0x8] sm:$0xff pattern:$0x75316420]
          %v1494 = vsel %vm1487, %v1490, 0.0
          %v1495 = vsel %vm1487, %v1491, 0.0
          %v1498 = vrot.slane %v1495, 4
          %vm1499 = vcmask 1043456
          %v1500 = vsel %vm1499, %v1494, %v1498
          %1502 = vst [vmem:[#allocation7] sm:$0xff] %v1500
        $region83: #{_milnet_call.1} parent=70 // pred_fallthru
          _
        // Predicated region
        $region84: #{_milnet_call.1} parent=70 // pred_check
          %p1503 = pneg %p232
        $region85: #{_milnet_call.1} parent=70 // pred_check_branch
          %1505 = sbr.rel (%p1503) target = $region87
        $region86: #{_milnet_call.1} parent=70 // pred_region
          %1507 = vsyncadd [#allocation8], 0
          %s1508 = smul.addr %s26, 2
          %s1509 = smul.addr %s1508, 4
          %s1510 = scalar_lea.hbm %s8, %s1509
          %s1512 = sshll.u32 [#allocation7], 4
          %s1513 = int_to_ptr.vmem [resolvable:$true] %s1512
          %s1514 = sshll.u32 %s1510, 4
          %s1515 = int_to_ptr.hbm [resolvable:$true] %s1514
          %1517 = dma.vmem_to_hbm [thread:$0]  %s1513, 128, %s1515, [#allocation8]
        $region87: #{_milnet_call.1} parent=70 // pred_fallthru
          _
        // Predicated region
        $region88: #{_milnet_call.1} parent=70 // pred_check
          %p1518 = pneg %p232
        $region89: #{_milnet_call.1} parent=70 // pred_check_branch
          %1520 = sbr.rel (%p1518) target = $region91
        $region90: #{_milnet_call.1} parent=70 // pred_region
          %1522 = dma.done [#allocation8], 128
        $region91: #{_milnet_call.1} parent=70 // pred_fallthru
          _
      $region71: #{_milnet_call.1} parent=5 // pred_fallthru
        _
      %p1523 = scmp.le.s32.totalorder 2, %s17
      // Predicated region
      $region92: #{_milnet_call.1} parent=5 // pred_check
        %p1524 = pneg %p1523
      $region93: #{_milnet_call.1} parent=5 // pred_check_branch
        %1526 = sbr.rel (%p1524) target = $region95
      $region94: #{_milnet_call.1} parent=5 // pred_region
        %s1527 = ssub.s32 %s17, 2
      $region95: #{_milnet_call.1} parent=5 // pred_fallthru
        _
    $region6: #{_milnet_call.1} parent=1 // loop_footer
      %s21 = sadd.s32 1, %s17
    $region7: #{_milnet_call.1} parent=1 // loop_footer_branch
      %16 = sbr.rel target = $region3
    $region8: #{_milnet_call.1} parent=1 // loop_exit
      _
    %1528 = vsyncpa [#allocation8], 1
    %s1529 = scalar_lea.sflag [#allocation8], 1
    %1530 = vsyncpa %s1529, 1

</llo_original>
